<compile_context>
chip_gen: v5e
topology: v5e:2x2
jax: 0.10.0
libtpu: 0.0.40
codegen_flags: <defaults>
</compile_context>

<pallas_src>
import math

import jax
import jax.numpy as jnp
from jax.experimental import pallas as pl
from jax.experimental.pallas import tpu as pltpu


# ----------------------------- parameter setup ------------------------------

def _dnn_layer_dims(input_size, first_out, mlp):
    """DeepNeuralNetwork(input_size, first_out, *mlp): Linear+ReLU stack,
    then Linear(last, 1)+Sigmoid."""
    dims = []
    cur = input_size
    for out in (first_out,) + tuple(mlp):
        dims.append((cur, out))
        cur = out
    dims.append((cur, 1))  # output_layer: Linear(cur, 1) + Sigmoid
    return dims


def _init_dnn(key, dims):
    layers = []
    for i, (k_in, n_out) in enumerate(dims):
        kw = jax.random.fold_in(key, 2 * i)
        kb = jax.random.fold_in(key, 2 * i + 1)
        bound = 1.0 / math.sqrt(k_in)
        w = jax.random.uniform(kw, (k_in, n_out), jnp.float32, -bound, bound)
        b = jax.random.uniform(kb, (1, n_out), jnp.float32, -bound, bound)
        layers.append((w, b))
    return layers


def init_deep_gru_params(key, hidden_size, input_size, mlp_architecture):
    # Order: Z_h, Z_x, R_h, R_x, H_hat_h, H_hat_x, fc  (as in the PyTorch ctor)
    specs = [
        (hidden_size, hidden_size),
        (input_size, hidden_size),
        (hidden_size, hidden_size),
        (input_size, hidden_size),
        (hidden_size, hidden_size),
        (input_size, hidden_size),
        (hidden_size, 1),
    ]
    params = []
    for i, (in_sz, first_out) in enumerate(specs):
        dims = _dnn_layer_dims(in_sz, first_out, mlp_architecture)
        params.append(_init_dnn(jax.random.fold_in(key, i), dims))
    return params


# ------------------------- host-side fusion & packing ------------------------

def _round_up(v, m):
    return ((v + m - 1) // m) * m


def _block_diag(mats):
    rows = sum(m.shape[0] for m in mats)
    cols = sum(m.shape[1] for m in mats)
    out = jnp.zeros((rows, cols), jnp.float32)
    r = c = 0
    for m in mats:
        out = out.at[r:r + m.shape[0], c:c + m.shape[1]].set(m.astype(jnp.float32))
        r += m.shape[0]
        c += m.shape[1]
    return out


def _fuse_chains(chains):
    """Fuse G DNN chains that share the same input into one G-wide chain:
    layer 0 weights concatenated along the output dim, deeper layers
    block-diagonal (chains stay independent), biases concatenated."""
    n_layers = len(chains[0])
    fused = []
    for l in range(n_layers):
        ws = [c[l][0] for c in chains]
        bs = [c[l][1] for c in chains]
        w = jnp.concatenate(ws, axis=1) if l == 0 else _block_diag(ws)
        b = jnp.concatenate([jnp.reshape(bb, (1, -1)) for bb in bs], axis=1)
        fused.append((w.astype(jnp.float32), b.astype(jnp.float32)))
    return fused


def _pack_slab(chains):
    """Pack every (w, b) of every chain into one (rows, 128*k) f32 slab.
    Each weight block starts at an 8-row-aligned offset; each bias gets its
    OWN 8-row-aligned slot (review item: no unaligned single-row slices).
    Returns (slab, metas) where metas mirrors `chains` with
    (weight_row_offset, bias_row_offset, K, N) tuples."""
    max_n = max(w.shape[1] for chain in chains for (w, _) in chain)
    padw = _round_up(max(max_n, 1), 128)
    blocks, metas, off = [], [], 0
    for chain in chains:
        cmeta = []
        for (w, b) in chain:
            K, N = w.shape
            wrows = _round_up(K, 8)
            blkw = jnp.zeros((wrows, padw), jnp.float32).at[:K, :N].set(
                w.astype(jnp.float32))
            blkb = jnp.zeros((8, padw), jnp.float32).at[:1, :N].set(
                jnp.reshape(b, (1, N)).astype(jnp.float32))
            blocks += [blkw, blkb]
            cmeta.append((off, off + wrows, K, N))
            off += wrows + 8
        metas.append(tuple(cmeta))
    return jnp.concatenate(blocks, axis=0), tuple(metas)


def _chain_flops(meta, rows):
    return sum(2 * rows * K * N for (_, _, K, N) in meta)


def _pick_t_tile(T, cap=16):
    cap = max(1, min(T, cap))
    for cand in range(cap, 0, -1):
        if T % cand == 0:
            return cand
    return 1


# ------------------------------ Pallas kernel -------------------------------

def _make_kernel(metas, n_zr0, n_hh0, t_tile, B_pad):
    meta_x, meta_h0, meta_zr_rest, meta_hh_rest, meta_fc = metas

    def kernel(x_ref, slab_ref, out_ref, hn_ref, hstate_ref):
        t_pid = pl.program_id(0)

        @pl.when(t_pid == 0)
        def _init():
            hstate_ref[...] = jnp.zeros_like(hstate_ref)

        def load_layer(m, bias_rows=1):
            off_w, off_b, K, N = m
            w = slab_ref[off_w:off_w + K, :N]          # static, 8-aligned start
            b = slab_ref[off_b:off_b + 1, :N]          # own 8-aligned slot
            if bias_rows > 1:                          # pre-broadcast once
                b = jnp.broadcast_to(b, (bias_rows, N))
            return w, b

        def load_chain(cmeta, bias_rows=1):
            return [load_layer(m, bias_rows) for m in cmeta]

        def dnn_apply(h, layers):
            n = len(layers)
            for i, (w, b) in enumerate(layers):
                if w.shape[0] == 1:        # K == 1 layer: VPU outer product, no MXU
                    h = h * w + b
                else:
                    h = jnp.dot(h, w, preferred_element_type=jnp.float32) + b
                h = jnp.maximum(h, 0.0) if i < n - 1 else jax.nn.sigmoid(h)
            return h

        # Loop-invariant weight materialization (static slices of resident slab).
        x_chain = load_chain(meta_x)                     # used once per tile
        w0_h, b0_h = load_layer(meta_h0[0], bias_rows=B_pad)   # fused [Zh|Rh|Hh] layer 0
        b0_zr = b0_h[:, :n_zr0]
        b0_hh = b0_h[:, n_zr0:n_zr0 + n_hh0]
        zr_rest = load_chain(meta_zr_rest, bias_rows=B_pad)
        hh_rest = load_chain(meta_hh_rest, bias_rows=B_pad)

        # Hoisted x-side gate contributions for this T tile: ONE batched matmul
        # chain over t_tile*B_pad rows.  Columns: [Z_x, R_x, H_hat_x] (sigmoid'd).
        gx = dnn_apply(x_ref[...], x_chain)              # (t_tile*B_pad, 3)

        # TODO(synk): for t_tile > ~16 switch this unrolled loop to lax.fori_loop
        # with hn as carry to bound vreg live ranges.
        hn = hstate_ref[...]
        for tt in range(t_tile):                         # t_tile static -> unroll
            gx_t = gx[tt * B_pad:(tt + 1) * B_pad, :]    # (B_pad, 3), 8-aligned slice

            # Single fused layer-0 matmul over hn for [Z_h | R_h | H_hat_h].
            # Folding H_hat_h's layer 0 here is exact ONLY because r is a
            # per-row scalar broadcast across the hidden contraction dim:
            # (hn * r) @ W0 == r * (hn @ W0).
            pre = jnp.dot(hn, w0_h, preferred_element_type=jnp.float32)  # (B_pad, n_zr0+n_hh0)

            zr = dnn_apply(jnp.maximum(pre[:, :n_zr0] + b0_zr, 0.0),
                           zr_rest)                      # (B_pad, 2): [Z_h, R_h]
            gates = jax.nn.sigmoid(zr + gx_t[:, 0:2])    # double sigmoid (as in torch)
            z = gates[:, 0:1]                            # (B_pad, 1) lane slice
            r = gates[:, 1:2]                            # (B_pad, 1) lane slice

            hh = dnn_apply(
                jnp.maximum(r * pre[:, n_zr0:n_zr0 + n_hh0] + b0_hh, 0.0),
                hh_rest)                                 # (B_pad, 1)
            h_hat = jnp.tanh(hh + gx_t[:, 2:3])          # (B_pad, 1)

            hn = hn * z + (1.0 - z) * h_hat              # (B_pad, H) via broadcast
        hstate_ref[...] = hn

        @pl.when(t_pid == pl.num_programs(0) - 1)
        def _final():
            hn_ref[...] = hn
            out_ref[...] = jax.nn.sigmoid(dnn_apply(hn, load_chain(meta_fc)))

    return kernel


def deep_gru_forward(x, params, hidden_size, t_tile=None):
    B, T, I = x.shape
    B_pad = _round_up(B, 8)            # full sublane occupancy (use >=128 on v6e/v7x prod)
    if t_tile is None:
        t_tile = _pick_t_tile(T, cap=16)
    assert T % t_tile == 0, "t_tile must divide T"
    n_tiles = T // t_tile

    # Pad batch to 8 sublanes; lay x out t-major so row t*B_pad + b <-> x[b, t, :]
    x_p = jnp.zeros((B_pad, T, I), jnp.float32).at[:B].set(x.astype(jnp.float32))
    x_flat = jnp.transpose(x_p, (1, 0, 2)).reshape(T * B_pad, I)

    Zh, Zx, Rh, Rx, Hh, Hx, FC = params
    x_chain = _fuse_chains([Zx, Rx, Hx])          # 3-wide x-side chain (hoisted)
    zr_full = _fuse_chains([Zh, Rh])              # 2-wide h-side chain
    # Fuse H_hat_h layer 0 into the h-side layer 0 (see kernel comment for why
    # this is exact); its remaining layers stay a separate chain.
    w0_h = jnp.concatenate([zr_full[0][0], Hh[0][0].astype(jnp.float32)], axis=1)
    b0_h = jnp.concatenate([zr_full[0][1],
                            jnp.reshape(Hh[0][1], (1, -1)).astype(jnp.float32)], axis=1)
    n_zr0 = zr_full[0][0].shape[1]
    n_hh0 = Hh[0][0].shape[1]

    chains = (
        x_chain,                                   # full fused x-side chain
        [(w0_h, b0_h)],                            # fused h-side layer 0 [Zh|Rh|Hh]
        list(zr_full[1:]),                         # Z_h/R_h layers 1..end (block-diag)
        [(w, b) for (w, b) in Hh[1:]],             # H_hat_h layers 1..end
        [(w, b) for (w, b) in FC],                 # fc chain
    )
    slab, metas = _pack_slab(chains)               # one f32 slab -> 2 kernel inputs

    kernel = _make_kernel(metas, n_zr0, n_hh0, t_tile, B_pad)

    flops = (_chain_flops(metas[0], T * B_pad)
             + T * (_chain_flops(metas[1], B_pad)
                    + _chain_flops(metas[2], B_pad)
                    + _chain_flops(metas[3], B_pad)
                    + 8 * B_pad * hidden_size)
             + _chain_flops(metas[4], B_pad))
    transcendentals = T * B_pad * 9 + 2 * B_pad
    bytes_accessed = 4 * (x_flat.size + slab.size + B_pad * (1 + hidden_size))

    # VMEM budget: double-buffered (lane-padded) x tile + resident slab + small
    # outputs, with headroom; capped well below v7x's 64 MiB physical VMEM.
    vmem_raw = 4 * (2 * t_tile * B_pad * 128 + slab.shape[0] * slab.shape[1]
                    + 4 * B_pad * 128)
    vmem_limit = int(min(max(2 * vmem_raw, 8 << 20), 64 << 20))

    out, hn = pl.pallas_call(
        kernel,
        out_shape=(
            jax.ShapeDtypeStruct((B_pad, 1), jnp.float32),
            jax.ShapeDtypeStruct((B_pad, hidden_size), jnp.float32),
        ),
        grid=(n_tiles,),
        in_specs=[
            pl.BlockSpec((t_tile * B_pad, I), lambda t: (t, 0)),   # pipelined x tile
            pl.BlockSpec(slab.shape, lambda t: (0, 0)),            # resident weights
        ],
        out_specs=(
            pl.BlockSpec((B_pad, 1), lambda t: (0, 0)),
            pl.BlockSpec((B_pad, hidden_size), lambda t: (0, 0)),
        ),
        scratch_shapes=[pltpu.VMEM((B_pad, hidden_size), jnp.float32)],  # persistent hn
        compiler_params=pltpu.CompilerParams(
            dimension_semantics=("arbitrary",),
            vmem_limit_bytes=vmem_limit),
        cost_estimate=pl.CostEstimate(flops=int(flops),
                                      transcendentals=int(transcendentals),
                                      bytes_accessed=int(bytes_accessed)),
    )(x_flat, slab)
    return out[:B], hn[:B]


# ------------------------------ pure-JAX reference ---------------------------

def _dnn_ref(h, layers):
    n = len(layers)
    for i, (w, b) in enumerate(layers):
        h = h @ w + b
        h = jnp.maximum(h, 0.0) if i < n - 1 else jax.nn.sigmoid(h)
    return h


def deep_gru_ref(x, params, hidden_size):
    B, T, _ = x.shape
    hn = jnp.zeros((B, hidden_size), jnp.float32)
    for t in range(T):
        xt = x[:, t, :]
        Z = jax.nn.sigmoid(_dnn_ref(hn, params[0]) + _dnn_ref(xt, params[1]))
        R = jax.nn.sigmoid(_dnn_ref(hn, params[2]) + _dnn_ref(xt, params[3]))
        H_hat = jnp.tanh(_dnn_ref(hn * R, params[4]) + _dnn_ref(xt, params[5]))
        hn = hn * Z + (1.0 - Z) * H_hat
    out = jax.nn.sigmoid(_dnn_ref(hn, params[6]))
    return out, hn


# ----------------------------------- main ------------------------------------

if __name__ == "__main__":
    B, T, I, H = 4, 8, 16, 32
    mlp_architecture = (16,)

    key = jax.random.PRNGKey(0)
    kx, kp = jax.random.split(key)
    x = jax.random.normal(kx, (B, T, I), jnp.float32)
    params = init_deep_gru_params(kp, H, I, mlp_architecture)

    # t_tile=4 -> grid=(2,): exercises the pipelined T axis + persistent hn scratch.
    out, hn = deep_gru_forward(x, params, H, t_tile=4)
    jax.block_until_ready((out, hn))

    out_ref, hn_ref = deep_gru_ref(x, params, H)
    assert out.shape == (B, 1) and hn.shape == (B, H)
    assert jnp.allclose(out, out_ref, atol=1e-5, rtol=1e-4)
    assert jnp.allclose(hn, hn_ref, atol=1e-5, rtol=1e-4)

    print("KERNEL_OK")
</pallas_src>

<mosaic_0001>
module attributes {stable_mosaic.version = 11 : i64} {
  func.func @kernel(%arg0: i32, %arg1: memref<32x16xf32, #tpu.memory_space<vmem>>, %arg2: memref<480x128xf32, #tpu.memory_space<vmem>>, %arg3: memref<8x1xf32, #tpu.memory_space<vmem>>, %arg4: memref<8x32xf32, #tpu.memory_space<vmem>>, %arg5: memref<8x32xf32, #tpu.memory_space<vmem>>) attributes {dimension_semantics = [#tpu.dimension_semantics<arbitrary>], iteration_bounds = array<i64: 2>, scalar_prefetch = 0 : i64, scratch_operands = 1 : i64, tpu.core_type = #tpu.core_type<tc>, window_params = [{transform_indices = @transform_0, window_bounds = array<i64: 32, 16>}, {pipeline_mode = #tpu.pipeline_mode<synchronous>, transform_indices = @transform_1, window_bounds = array<i64: 480, 128>}, {pipeline_mode = #tpu.pipeline_mode<synchronous>, transform_indices = @transform_2, window_bounds = array<i64: 8, 1>}, {pipeline_mode = #tpu.pipeline_mode<synchronous>, transform_indices = @transform_3, window_bounds = array<i64: 8, 32>}]} {
    %c0_i32 = arith.constant 0 : i32
    %0 = arith.cmpi eq, %arg0, %c0_i32 : i32
    %1 = arith.extui %0 : i1 to i32
    %c0_i32_0 = arith.constant 0 : i32
    %2 = arith.cmpi ne, %1, %c0_i32_0 : i32
    scf.if %2 {
      %cst_81 = arith.constant 0.000000e+00 : f32
      %267 = vector.broadcast %cst_81 : f32 to vector<8x32xf32>
      %c0_82 = arith.constant 0 : index
      %c0_83 = arith.constant 0 : index
      %268 = vector.load %arg5[%c0_82, %c0_83] : memref<8x32xf32, #tpu.memory_space<vmem>>, vector<8x32xf32>
      tpu.vector_store %arg5[%c0_82, %c0_83], %267 {strides = array<i32>} : memref<8x32xf32, #tpu.memory_space<vmem>>, vector<8x32xf32>,
    } else {
    }
    %c0 = arith.constant 0 : index
    %c0_1 = arith.constant 0 : index
    %3 = vector.load %arg2[%c0, %c0_1] : memref<480x128xf32, #tpu.memory_space<vmem>>, vector<16x96xf32>
    %c16 = arith.constant 16 : index
    %c0_2 = arith.constant 0 : index
    %4 = vector.load %arg2[%c16, %c0_2] : memref<480x128xf32, #tpu.memory_space<vmem>>, vector<1x96xf32>
    %c24 = arith.constant 24 : index
    %c0_3 = arith.constant 0 : index
    %5 = vector.load %arg2[%c24, %c0_3] : memref<480x128xf32, #tpu.memory_space<vmem>>, vector<96x48xf32>
    %c120 = arith.constant 120 : index
    %c0_4 = arith.constant 0 : index
    %6 = vector.load %arg2[%c120, %c0_4] : memref<480x128xf32, #tpu.memory_space<vmem>>, vector<1x48xf32>
    %c128 = arith.constant 128 : index
    %c0_5 = arith.constant 0 : index
    %7 = vector.load %arg2[%c128, %c0_5] : memref<480x128xf32, #tpu.memory_space<vmem>>, vector<48x3xf32>
    %c176 = arith.constant 176 : index
    %c0_6 = arith.constant 0 : index
    %8 = vector.load %arg2[%c176, %c0_6] : memref<480x128xf32, #tpu.memory_space<vmem>>, vector<1x3xf32>
    %c184 = arith.constant 184 : index
    %c0_7 = arith.constant 0 : index
    %9 = vector.load %arg2[%c184, %c0_7] : memref<480x128xf32, #tpu.memory_space<vmem>>, vector<32x96xf32>
    %c216 = arith.constant 216 : index
    %c0_8 = arith.constant 0 : index
    %10 = vector.load %arg2[%c216, %c0_8] : memref<480x128xf32, #tpu.memory_space<vmem>>, vector<1x96xf32>
    %11 = vector.shape_cast %10 : vector<1x96xf32> to vector<1x96xf32>
    %12 = vector.broadcast %11 : vector<1x96xf32> to vector<8x96xf32>
    %13 = vector.extract_strided_slice %12 {offsets = [0, 0], sizes = [8, 64], strides = [1, 1]} : vector<8x96xf32> to vector<8x64xf32>
    %14 = vector.extract_strided_slice %12 {offsets = [0, 64], sizes = [8, 32], strides = [1, 1]} : vector<8x96xf32> to vector<8x32xf32>
    %c224 = arith.constant 224 : index
    %c0_9 = arith.constant 0 : index
    %15 = vector.load %arg2[%c224, %c0_9] : memref<480x128xf32, #tpu.memory_space<vmem>>, vector<64x32xf32>
    %c288 = arith.constant 288 : index
    %c0_10 = arith.constant 0 : index
    %16 = vector.load %arg2[%c288, %c0_10] : memref<480x128xf32, #tpu.memory_space<vmem>>, vector<1x32xf32>
    %17 = vector.shape_cast %16 : vector<1x32xf32> to vector<1x32xf32>
    %18 = vector.broadcast %17 : vector<1x32xf32> to vector<8x32xf32>
    %c296 = arith.constant 296 : index
    %c0_11 = arith.constant 0 : index
    %19 = vector.load %arg2[%c296, %c0_11] : memref<480x128xf32, #tpu.memory_space<vmem>>, vector<32x2xf32>
    %c328 = arith.constant 328 : index
    %c0_12 = arith.constant 0 : index
    %20 = vector.load %arg2[%c328, %c0_12] : memref<480x128xf32, #tpu.memory_space<vmem>>, vector<1x2xf32>
    %21 = vector.shape_cast %20 : vector<1x2xf32> to vector<1x2xf32>
    %22 = vector.broadcast %21 : vector<1x2xf32> to vector<8x2xf32>
    %c336 = arith.constant 336 : index
    %c0_13 = arith.constant 0 : index
    %23 = vector.load %arg2[%c336, %c0_13] : memref<480x128xf32, #tpu.memory_space<vmem>>, vector<32x16xf32>
    %c368 = arith.constant 368 : index
    %c0_14 = arith.constant 0 : index
    %24 = vector.load %arg2[%c368, %c0_14] : memref<480x128xf32, #tpu.memory_space<vmem>>, vector<1x16xf32>
    %25 = vector.shape_cast %24 : vector<1x16xf32> to vector<1x16xf32>
    %26 = vector.broadcast %25 : vector<1x16xf32> to vector<8x16xf32>
    %c376 = arith.constant 376 : index
    %c0_15 = arith.constant 0 : index
    %27 = vector.load %arg2[%c376, %c0_15] : memref<480x128xf32, #tpu.memory_space<vmem>>, vector<16x1xf32>
    %c392 = arith.constant 392 : index
    %c0_16 = arith.constant 0 : index
    %28 = vector.load %arg2[%c392, %c0_16] : memref<480x128xf32, #tpu.memory_space<vmem>>, vector<1x1xf32>
    %29 = vector.shape_cast %28 : vector<1x1xf32> to vector<1x1xf32>
    %30 = vector.broadcast %29 : vector<1x1xf32> to vector<8x1xf32>
    %c0_17 = arith.constant 0 : index
    %c0_18 = arith.constant 0 : index
    %31 = vector.load %arg1[%c0_17, %c0_18] : memref<32x16xf32, #tpu.memory_space<vmem>>, vector<32x16xf32>
    %cst = arith.constant dense<0.000000e+00> : vector<32x96xf32>
    %32 = tpu.matmul %31, %3, %cst {dimension_numbers = #tpu.dot_dimension_numbers<[1], [0], [0], [1], [0, 0, 1, 1], [], []>} : vector<32x16xf32>, vector<16x96xf32>, vector<32x96xf32> -> vector<32x96xf32>
    %33 = vector.broadcast %4 : vector<1x96xf32> to vector<32x96xf32>
    %34 = arith.addf %32, %33 : vector<32x96xf32>
    %cst_19 = arith.constant 0.000000e+00 : f32
    %35 = vector.broadcast %cst_19 : f32 to vector<32x96xf32>
    %36 = arith.maximumf %34, %35 : vector<32x96xf32>
    %cst_20 = arith.constant dense<0.000000e+00> : vector<32x48xf32>
    %37 = tpu.matmul %36, %5, %cst_20 {dimension_numbers = #tpu.dot_dimension_numbers<[1], [0], [0], [1], [0, 0, 1, 1], [], []>} : vector<32x96xf32>, vector<96x48xf32>, vector<32x48xf32> -> vector<32x48xf32>
    %38 = vector.broadcast %6 : vector<1x48xf32> to vector<32x48xf32>
    %39 = arith.addf %37, %38 : vector<32x48xf32>
    %cst_21 = arith.constant 0.000000e+00 : f32
    %40 = vector.broadcast %cst_21 : f32 to vector<32x48xf32>
    %41 = arith.maximumf %39, %40 : vector<32x48xf32>
    %cst_22 = arith.constant dense<0.000000e+00> : vector<32x3xf32>
    %42 = tpu.matmul %41, %7, %cst_22 {dimension_numbers = #tpu.dot_dimension_numbers<[1], [0], [0], [1], [0, 0, 1, 1], [], []>} : vector<32x48xf32>, vector<48x3xf32>, vector<32x3xf32> -> vector<32x3xf32>
    %43 = vector.broadcast %8 : vector<1x3xf32> to vector<32x3xf32>
    %44 = arith.addf %42, %43 : vector<32x3xf32>
    %45 = arith.negf %44 : vector<32x3xf32>
    %46 = math.exp %45 : vector<32x3xf32>
    %cst_23 = arith.constant 1.000000e+00 : f32
    %47 = vector.broadcast %cst_23 : f32 to vector<32x3xf32>
    %48 = arith.addf %47, %46 : vector<32x3xf32>
    %49 = arith.divf %47, %48 : vector<32x3xf32>
    %c0_24 = arith.constant 0 : index
    %c0_25 = arith.constant 0 : index
    %50 = vector.load %arg5[%c0_24, %c0_25] : memref<8x32xf32, #tpu.memory_space<vmem>>, vector<8x32xf32>
    %51 = vector.extract_strided_slice %49 {offsets = [0, 0], sizes = [8, 3], strides = [1, 1]} : vector<32x3xf32> to vector<8x3xf32>
    %cst_26 = arith.constant dense<0.000000e+00> : vector<8x96xf32>
    %52 = tpu.matmul %50, %9, %cst_26 {dimension_numbers = #tpu.dot_dimension_numbers<[1], [0], [0], [1], [0, 0, 1, 1], [], []>} : vector<8x32xf32>, vector<32x96xf32>, vector<8x96xf32> -> vector<8x96xf32>
    %53 = vector.extract_strided_slice %52 {offsets = [0, 0], sizes = [8, 64], strides = [1, 1]} : vector<8x96xf32> to vector<8x64xf32>
    %54 = arith.addf %53, %13 : vector<8x64xf32>
    %cst_27 = arith.constant 0.000000e+00 : f32
    %55 = vector.broadcast %cst_27 : f32 to vector<8x64xf32>
    %56 = arith.maximumf %54, %55 : vector<8x64xf32>
    %cst_28 = arith.constant dense<0.000000e+00> : vector<8x32xf32>
    %57 = tpu.matmul %56, %15, %cst_28 {dimension_numbers = #tpu.dot_dimension_numbers<[1], [0], [0], [1], [0, 0, 1, 1], [], []>} : vector<8x64xf32>, vector<64x32xf32>, vector<8x32xf32> -> vector<8x32xf32>
    %58 = arith.addf %57, %18 : vector<8x32xf32>
    %cst_29 = arith.constant 0.000000e+00 : f32
    %59 = vector.broadcast %cst_29 : f32 to vector<8x32xf32>
    %60 = arith.maximumf %58, %59 : vector<8x32xf32>
    %cst_30 = arith.constant dense<0.000000e+00> : vector<8x2xf32>
    %61 = tpu.matmul %60, %19, %cst_30 {dimension_numbers = #tpu.dot_dimension_numbers<[1], [0], [0], [1], [0, 0, 1, 1], [], []>} : vector<8x32xf32>, vector<32x2xf32>, vector<8x2xf32> -> vector<8x2xf32>
    %62 = arith.addf %61, %22 : vector<8x2xf32>
    %63 = arith.negf %62 : vector<8x2xf32>
    %64 = math.exp %63 : vector<8x2xf32>
    %cst_31 = arith.constant 1.000000e+00 : f32
    %65 = vector.broadcast %cst_31 : f32 to vector<8x2xf32>
    %66 = arith.addf %65, %64 : vector<8x2xf32>
    %67 = arith.divf %65, %66 : vector<8x2xf32>
    %68 = vector.extract_strided_slice %51 {offsets = [0, 0], sizes = [8, 2], strides = [1, 1]} : vector<8x3xf32> to vector<8x2xf32>
    %69 = arith.addf %67, %68 : vector<8x2xf32>
    %70 = arith.negf %69 : vector<8x2xf32>
    %71 = math.exp %70 : vector<8x2xf32>
    %cst_32 = arith.constant 1.000000e+00 : f32
    %72 = vector.broadcast %cst_32 : f32 to vector<8x2xf32>
    %73 = arith.addf %72, %71 : vector<8x2xf32>
    %74 = arith.divf %72, %73 : vector<8x2xf32>
    %75 = vector.extract_strided_slice %74 {offsets = [0, 0], sizes = [8, 1], strides = [1, 1]} : vector<8x2xf32> to vector<8x1xf32>
    %76 = vector.extract_strided_slice %74 {offsets = [0, 1], sizes = [8, 1], strides = [1, 1]} : vector<8x2xf32> to vector<8x1xf32>
    %77 = vector.extract_strided_slice %52 {offsets = [0, 64], sizes = [8, 32], strides = [1, 1]} : vector<8x96xf32> to vector<8x32xf32>
    %78 = vector.broadcast %76 : vector<8x1xf32> to vector<8x32xf32>
    %79 = arith.mulf %78, %77 : vector<8x32xf32>
    %80 = arith.addf %79, %14 : vector<8x32xf32>
    %cst_33 = arith.constant 0.000000e+00 : f32
    %81 = vector.broadcast %cst_33 : f32 to vector<8x32xf32>
    %82 = arith.maximumf %80, %81 : vector<8x32xf32>
    %cst_34 = arith.constant dense<0.000000e+00> : vector<8x16xf32>
    %83 = tpu.matmul %82, %23, %cst_34 {dimension_numbers = #tpu.dot_dimension_numbers<[1], [0], [0], [1], [0, 0, 1, 1], [], []>} : vector<8x32xf32>, vector<32x16xf32>, vector<8x16xf32> -> vector<8x16xf32>
    %84 = arith.addf %83, %26 : vector<8x16xf32>
    %cst_35 = arith.constant 0.000000e+00 : f32
    %85 = vector.broadcast %cst_35 : f32 to vector<8x16xf32>
    %86 = arith.maximumf %84, %85 : vector<8x16xf32>
    %cst_36 = arith.constant dense<0.000000e+00> : vector<8x1xf32>
    %87 = tpu.matmul %86, %27, %cst_36 {dimension_numbers = #tpu.dot_dimension_numbers<[1], [0], [0], [1], [0, 0, 1, 1], [], []>} : vector<8x16xf32>, vector<16x1xf32>, vector<8x1xf32> -> vector<8x1xf32>
    %88 = arith.addf %87, %30 : vector<8x1xf32>
    %89 = arith.negf %88 : vector<8x1xf32>
    %90 = math.exp %89 : vector<8x1xf32>
    %cst_37 = arith.constant 1.000000e+00 : f32
    %91 = vector.broadcast %cst_37 : f32 to vector<8x1xf32>
    %92 = arith.addf %91, %90 : vector<8x1xf32>
    %93 = arith.divf %91, %92 : vector<8x1xf32>
    %94 = vector.extract_strided_slice %51 {offsets = [0, 2], sizes = [8, 1], strides = [1, 1]} : vector<8x3xf32> to vector<8x1xf32>
    %95 = arith.addf %93, %94 : vector<8x1xf32>
    %96 = math.tanh %95 : vector<8x1xf32>
    %97 = vector.broadcast %75 : vector<8x1xf32> to vector<8x32xf32>
    %98 = arith.mulf %50, %97 : vector<8x32xf32>
    %cst_38 = arith.constant 1.000000e+00 : f32
    %99 = vector.broadcast %cst_38 : f32 to vector<8x1xf32>
    %100 = arith.subf %99, %75 : vector<8x1xf32>
    %101 = arith.mulf %100, %96 : vector<8x1xf32>
    %102 = vector.broadcast %101 : vector<8x1xf32> to vector<8x32xf32>
    %103 = arith.addf %98, %102 : vector<8x32xf32>
    %104 = vector.extract_strided_slice %49 {offsets = [8, 0], sizes = [8, 3], strides = [1, 1]} : vector<32x3xf32> to vector<8x3xf32>
    %cst_39 = arith.constant dense<0.000000e+00> : vector<8x96xf32>
    %105 = tpu.matmul %103, %9, %cst_39 {dimension_numbers = #tpu.dot_dimension_numbers<[1], [0], [0], [1], [0, 0, 1, 1], [], []>} : vector<8x32xf32>, vector<32x96xf32>, vector<8x96xf32> -> vector<8x96xf32>
    %106 = vector.extract_strided_slice %105 {offsets = [0, 0], sizes = [8, 64], strides = [1, 1]} : vector<8x96xf32> to vector<8x64xf32>
    %107 = arith.addf %106, %13 : vector<8x64xf32>
    %cst_40 = arith.constant 0.000000e+00 : f32
    %108 = vector.broadcast %cst_40 : f32 to vector<8x64xf32>
    %109 = arith.maximumf %107, %108 : vector<8x64xf32>
    %cst_41 = arith.constant dense<0.000000e+00> : vector<8x32xf32>
    %110 = tpu.matmul %109, %15, %cst_41 {dimension_numbers = #tpu.dot_dimension_numbers<[1], [0], [0], [1], [0, 0, 1, 1], [], []>} : vector<8x64xf32>, vector<64x32xf32>, vector<8x32xf32> -> vector<8x32xf32>
    %111 = arith.addf %110, %18 : vector<8x32xf32>
    %cst_42 = arith.constant 0.000000e+00 : f32
    %112 = vector.broadcast %cst_42 : f32 to vector<8x32xf32>
    %113 = arith.maximumf %111, %112 : vector<8x32xf32>
    %cst_43 = arith.constant dense<0.000000e+00> : vector<8x2xf32>
    %114 = tpu.matmul %113, %19, %cst_43 {dimension_numbers = #tpu.dot_dimension_numbers<[1], [0], [0], [1], [0, 0, 1, 1], [], []>} : vector<8x32xf32>, vector<32x2xf32>, vector<8x2xf32> -> vector<8x2xf32>
    %115 = arith.addf %114, %22 : vector<8x2xf32>
    %116 = arith.negf %115 : vector<8x2xf32>
    %117 = math.exp %116 : vector<8x2xf32>
    %cst_44 = arith.constant 1.000000e+00 : f32
    %118 = vector.broadcast %cst_44 : f32 to vector<8x2xf32>
    %119 = arith.addf %118, %117 : vector<8x2xf32>
    %120 = arith.divf %118, %119 : vector<8x2xf32>
    %121 = vector.extract_strided_slice %104 {offsets = [0, 0], sizes = [8, 2], strides = [1, 1]} : vector<8x3xf32> to vector<8x2xf32>
    %122 = arith.addf %120, %121 : vector<8x2xf32>
    %123 = arith.negf %122 : vector<8x2xf32>
    %124 = math.exp %123 : vector<8x2xf32>
    %cst_45 = arith.constant 1.000000e+00 : f32
    %125 = vector.broadcast %cst_45 : f32 to vector<8x2xf32>
    %126 = arith.addf %125, %124 : vector<8x2xf32>
    %127 = arith.divf %125, %126 : vector<8x2xf32>
    %128 = vector.extract_strided_slice %127 {offsets = [0, 0], sizes = [8, 1], strides = [1, 1]} : vector<8x2xf32> to vector<8x1xf32>
    %129 = vector.extract_strided_slice %127 {offsets = [0, 1], sizes = [8, 1], strides = [1, 1]} : vector<8x2xf32> to vector<8x1xf32>
    %130 = vector.extract_strided_slice %105 {offsets = [0, 64], sizes = [8, 32], strides = [1, 1]} : vector<8x96xf32> to vector<8x32xf32>
    %131 = vector.broadcast %129 : vector<8x1xf32> to vector<8x32xf32>
    %132 = arith.mulf %131, %130 : vector<8x32xf32>
    %133 = arith.addf %132, %14 : vector<8x32xf32>
    %cst_46 = arith.constant 0.000000e+00 : f32
    %134 = vector.broadcast %cst_46 : f32 to vector<8x32xf32>
    %135 = arith.maximumf %133, %134 : vector<8x32xf32>
    %cst_47 = arith.constant dense<0.000000e+00> : vector<8x16xf32>
    %136 = tpu.matmul %135, %23, %cst_47 {dimension_numbers = #tpu.dot_dimension_numbers<[1], [0], [0], [1], [0, 0, 1, 1], [], []>} : vector<8x32xf32>, vector<32x16xf32>, vector<8x16xf32> -> vector<8x16xf32>
    %137 = arith.addf %136, %26 : vector<8x16xf32>
    %cst_48 = arith.constant 0.000000e+00 : f32
    %138 = vector.broadcast %cst_48 : f32 to vector<8x16xf32>
    %139 = arith.maximumf %137, %138 : vector<8x16xf32>
    %cst_49 = arith.constant dense<0.000000e+00> : vector<8x1xf32>
    %140 = tpu.matmul %139, %27, %cst_49 {dimension_numbers = #tpu.dot_dimension_numbers<[1], [0], [0], [1], [0, 0, 1, 1], [], []>} : vector<8x16xf32>, vector<16x1xf32>, vector<8x1xf32> -> vector<8x1xf32>
    %141 = arith.addf %140, %30 : vector<8x1xf32>
    %142 = arith.negf %141 : vector<8x1xf32>
    %143 = math.exp %142 : vector<8x1xf32>
    %cst_50 = arith.constant 1.000000e+00 : f32
    %144 = vector.broadcast %cst_50 : f32 to vector<8x1xf32>
    %145 = arith.addf %144, %143 : vector<8x1xf32>
    %146 = arith.divf %144, %145 : vector<8x1xf32>
    %147 = vector.extract_strided_slice %104 {offsets = [0, 2], sizes = [8, 1], strides = [1, 1]} : vector<8x3xf32> to vector<8x1xf32>
    %148 = arith.addf %146, %147 : vector<8x1xf32>
    %149 = math.tanh %148 : vector<8x1xf32>
    %150 = vector.broadcast %128 : vector<8x1xf32> to vector<8x32xf32>
    %151 = arith.mulf %103, %150 : vector<8x32xf32>
    %cst_51 = arith.constant 1.000000e+00 : f32
    %152 = vector.broadcast %cst_51 : f32 to vector<8x1xf32>
    %153 = arith.subf %152, %128 : vector<8x1xf32>
    %154 = arith.mulf %153, %149 : vector<8x1xf32>
    %155 = vector.broadcast %154 : vector<8x1xf32> to vector<8x32xf32>
    %156 = arith.addf %151, %155 : vector<8x32xf32>
    %157 = vector.extract_strided_slice %49 {offsets = [16, 0], sizes = [8, 3], strides = [1, 1]} : vector<32x3xf32> to vector<8x3xf32>
    %cst_52 = arith.constant dense<0.000000e+00> : vector<8x96xf32>
    %158 = tpu.matmul %156, %9, %cst_52 {dimension_numbers = #tpu.dot_dimension_numbers<[1], [0], [0], [1], [0, 0, 1, 1], [], []>} : vector<8x32xf32>, vector<32x96xf32>, vector<8x96xf32> -> vector<8x96xf32>
    %159 = vector.extract_strided_slice %158 {offsets = [0, 0], sizes = [8, 64], strides = [1, 1]} : vector<8x96xf32> to vector<8x64xf32>
    %160 = arith.addf %159, %13 : vector<8x64xf32>
    %cst_53 = arith.constant 0.000000e+00 : f32
    %161 = vector.broadcast %cst_53 : f32 to vector<8x64xf32>
    %162 = arith.maximumf %160, %161 : vector<8x64xf32>
    %cst_54 = arith.constant dense<0.000000e+00> : vector<8x32xf32>
    %163 = tpu.matmul %162, %15, %cst_54 {dimension_numbers = #tpu.dot_dimension_numbers<[1], [0], [0], [1], [0, 0, 1, 1], [], []>} : vector<8x64xf32>, vector<64x32xf32>, vector<8x32xf32> -> vector<8x32xf32>
    %164 = arith.addf %163, %18 : vector<8x32xf32>
    %cst_55 = arith.constant 0.000000e+00 : f32
    %165 = vector.broadcast %cst_55 : f32 to vector<8x32xf32>
    %166 = arith.maximumf %164, %165 : vector<8x32xf32>
    %cst_56 = arith.constant dense<0.000000e+00> : vector<8x2xf32>
    %167 = tpu.matmul %166, %19, %cst_56 {dimension_numbers = #tpu.dot_dimension_numbers<[1], [0], [0], [1], [0, 0, 1, 1], [], []>} : vector<8x32xf32>, vector<32x2xf32>, vector<8x2xf32> -> vector<8x2xf32>
    %168 = arith.addf %167, %22 : vector<8x2xf32>
    %169 = arith.negf %168 : vector<8x2xf32>
    %170 = math.exp %169 : vector<8x2xf32>
    %cst_57 = arith.constant 1.000000e+00 : f32
    %171 = vector.broadcast %cst_57 : f32 to vector<8x2xf32>
    %172 = arith.addf %171, %170 : vector<8x2xf32>
    %173 = arith.divf %171, %172 : vector<8x2xf32>
    %174 = vector.extract_strided_slice %157 {offsets = [0, 0], sizes = [8, 2], strides = [1, 1]} : vector<8x3xf32> to vector<8x2xf32>
    %175 = arith.addf %173, %174 : vector<8x2xf32>
    %176 = arith.negf %175 : vector<8x2xf32>
    %177 = math.exp %176 : vector<8x2xf32>
    %cst_58 = arith.constant 1.000000e+00 : f32
    %178 = vector.broadcast %cst_58 : f32 to vector<8x2xf32>
    %179 = arith.addf %178, %177 : vector<8x2xf32>
    %180 = arith.divf %178, %179 : vector<8x2xf32>
    %181 = vector.extract_strided_slice %180 {offsets = [0, 0], sizes = [8, 1], strides = [1, 1]} : vector<8x2xf32> to vector<8x1xf32>
    %182 = vector.extract_strided_slice %180 {offsets = [0, 1], sizes = [8, 1], strides = [1, 1]} : vector<8x2xf32> to vector<8x1xf32>
    %183 = vector.extract_strided_slice %158 {offsets = [0, 64], sizes = [8, 32], strides = [1, 1]} : vector<8x96xf32> to vector<8x32xf32>
    %184 = vector.broadcast %182 : vector<8x1xf32> to vector<8x32xf32>
    %185 = arith.mulf %184, %183 : vector<8x32xf32>
    %186 = arith.addf %185, %14 : vector<8x32xf32>
    %cst_59 = arith.constant 0.000000e+00 : f32
    %187 = vector.broadcast %cst_59 : f32 to vector<8x32xf32>
    %188 = arith.maximumf %186, %187 : vector<8x32xf32>
    %cst_60 = arith.constant dense<0.000000e+00> : vector<8x16xf32>
    %189 = tpu.matmul %188, %23, %cst_60 {dimension_numbers = #tpu.dot_dimension_numbers<[1], [0], [0], [1], [0, 0, 1, 1], [], []>} : vector<8x32xf32>, vector<32x16xf32>, vector<8x16xf32> -> vector<8x16xf32>
    %190 = arith.addf %189, %26 : vector<8x16xf32>
    %cst_61 = arith.constant 0.000000e+00 : f32
    %191 = vector.broadcast %cst_61 : f32 to vector<8x16xf32>
    %192 = arith.maximumf %190, %191 : vector<8x16xf32>
    %cst_62 = arith.constant dense<0.000000e+00> : vector<8x1xf32>
    %193 = tpu.matmul %192, %27, %cst_62 {dimension_numbers = #tpu.dot_dimension_numbers<[1], [0], [0], [1], [0, 0, 1, 1], [], []>} : vector<8x16xf32>, vector<16x1xf32>, vector<8x1xf32> -> vector<8x1xf32>
    %194 = arith.addf %193, %30 : vector<8x1xf32>
    %195 = arith.negf %194 : vector<8x1xf32>
    %196 = math.exp %195 : vector<8x1xf32>
    %cst_63 = arith.constant 1.000000e+00 : f32
    %197 = vector.broadcast %cst_63 : f32 to vector<8x1xf32>
    %198 = arith.addf %197, %196 : vector<8x1xf32>
    %199 = arith.divf %197, %198 : vector<8x1xf32>
    %200 = vector.extract_strided_slice %157 {offsets = [0, 2], sizes = [8, 1], strides = [1, 1]} : vector<8x3xf32> to vector<8x1xf32>
    %201 = arith.addf %199, %200 : vector<8x1xf32>
    %202 = math.tanh %201 : vector<8x1xf32>
    %203 = vector.broadcast %181 : vector<8x1xf32> to vector<8x32xf32>
    %204 = arith.mulf %156, %203 : vector<8x32xf32>
    %cst_64 = arith.constant 1.000000e+00 : f32
    %205 = vector.broadcast %cst_64 : f32 to vector<8x1xf32>
    %206 = arith.subf %205, %181 : vector<8x1xf32>
    %207 = arith.mulf %206, %202 : vector<8x1xf32>
    %208 = vector.broadcast %207 : vector<8x1xf32> to vector<8x32xf32>
    %209 = arith.addf %204, %208 : vector<8x32xf32>
    %210 = vector.extract_strided_slice %49 {offsets = [24, 0], sizes = [8, 3], strides = [1, 1]} : vector<32x3xf32> to vector<8x3xf32>
    %cst_65 = arith.constant dense<0.000000e+00> : vector<8x96xf32>
    %211 = tpu.matmul %209, %9, %cst_65 {dimension_numbers = #tpu.dot_dimension_numbers<[1], [0], [0], [1], [0, 0, 1, 1], [], []>} : vector<8x32xf32>, vector<32x96xf32>, vector<8x96xf32> -> vector<8x96xf32>
    %212 = vector.extract_strided_slice %211 {offsets = [0, 0], sizes = [8, 64], strides = [1, 1]} : vector<8x96xf32> to vector<8x64xf32>
    %213 = arith.addf %212, %13 : vector<8x64xf32>
    %cst_66 = arith.constant 0.000000e+00 : f32
    %214 = vector.broadcast %cst_66 : f32 to vector<8x64xf32>
    %215 = arith.maximumf %213, %214 : vector<8x64xf32>
    %cst_67 = arith.constant dense<0.000000e+00> : vector<8x32xf32>
    %216 = tpu.matmul %215, %15, %cst_67 {dimension_numbers = #tpu.dot_dimension_numbers<[1], [0], [0], [1], [0, 0, 1, 1], [], []>} : vector<8x64xf32>, vector<64x32xf32>, vector<8x32xf32> -> vector<8x32xf32>
    %217 = arith.addf %216, %18 : vector<8x32xf32>
    %cst_68 = arith.constant 0.000000e+00 : f32
    %218 = vector.broadcast %cst_68 : f32 to vector<8x32xf32>
    %219 = arith.maximumf %217, %218 : vector<8x32xf32>
    %cst_69 = arith.constant dense<0.000000e+00> : vector<8x2xf32>
    %220 = tpu.matmul %219, %19, %cst_69 {dimension_numbers = #tpu.dot_dimension_numbers<[1], [0], [0], [1], [0, 0, 1, 1], [], []>} : vector<8x32xf32>, vector<32x2xf32>, vector<8x2xf32> -> vector<8x2xf32>
    %221 = arith.addf %220, %22 : vector<8x2xf32>
    %222 = arith.negf %221 : vector<8x2xf32>
    %223 = math.exp %222 : vector<8x2xf32>
    %cst_70 = arith.constant 1.000000e+00 : f32
    %224 = vector.broadcast %cst_70 : f32 to vector<8x2xf32>
    %225 = arith.addf %224, %223 : vector<8x2xf32>
    %226 = arith.divf %224, %225 : vector<8x2xf32>
    %227 = vector.extract_strided_slice %210 {offsets = [0, 0], sizes = [8, 2], strides = [1, 1]} : vector<8x3xf32> to vector<8x2xf32>
    %228 = arith.addf %226, %227 : vector<8x2xf32>
    %229 = arith.negf %228 : vector<8x2xf32>
    %230 = math.exp %229 : vector<8x2xf32>
    %cst_71 = arith.constant 1.000000e+00 : f32
    %231 = vector.broadcast %cst_71 : f32 to vector<8x2xf32>
    %232 = arith.addf %231, %230 : vector<8x2xf32>
    %233 = arith.divf %231, %232 : vector<8x2xf32>
    %234 = vector.extract_strided_slice %233 {offsets = [0, 0], sizes = [8, 1], strides = [1, 1]} : vector<8x2xf32> to vector<8x1xf32>
    %235 = vector.extract_strided_slice %233 {offsets = [0, 1], sizes = [8, 1], strides = [1, 1]} : vector<8x2xf32> to vector<8x1xf32>
    %236 = vector.extract_strided_slice %211 {offsets = [0, 64], sizes = [8, 32], strides = [1, 1]} : vector<8x96xf32> to vector<8x32xf32>
    %237 = vector.broadcast %235 : vector<8x1xf32> to vector<8x32xf32>
    %238 = arith.mulf %237, %236 : vector<8x32xf32>
    %239 = arith.addf %238, %14 : vector<8x32xf32>
    %cst_72 = arith.constant 0.000000e+00 : f32
    %240 = vector.broadcast %cst_72 : f32 to vector<8x32xf32>
    %241 = arith.maximumf %239, %240 : vector<8x32xf32>
    %cst_73 = arith.constant dense<0.000000e+00> : vector<8x16xf32>
    %242 = tpu.matmul %241, %23, %cst_73 {dimension_numbers = #tpu.dot_dimension_numbers<[1], [0], [0], [1], [0, 0, 1, 1], [], []>} : vector<8x32xf32>, vector<32x16xf32>, vector<8x16xf32> -> vector<8x16xf32>
    %243 = arith.addf %242, %26 : vector<8x16xf32>
    %cst_74 = arith.constant 0.000000e+00 : f32
    %244 = vector.broadcast %cst_74 : f32 to vector<8x16xf32>
    %245 = arith.maximumf %243, %244 : vector<8x16xf32>
    %cst_75 = arith.constant dense<0.000000e+00> : vector<8x1xf32>
    %246 = tpu.matmul %245, %27, %cst_75 {dimension_numbers = #tpu.dot_dimension_numbers<[1], [0], [0], [1], [0, 0, 1, 1], [], []>} : vector<8x16xf32>, vector<16x1xf32>, vector<8x1xf32> -> vector<8x1xf32>
    %247 = arith.addf %246, %30 : vector<8x1xf32>
    %248 = arith.negf %247 : vector<8x1xf32>
    %249 = math.exp %248 : vector<8x1xf32>
    %cst_76 = arith.constant 1.000000e+00 : f32
    %250 = vector.broadcast %cst_76 : f32 to vector<8x1xf32>
    %251 = arith.addf %250, %249 : vector<8x1xf32>
    %252 = arith.divf %250, %251 : vector<8x1xf32>
    %253 = vector.extract_strided_slice %210 {offsets = [0, 2], sizes = [8, 1], strides = [1, 1]} : vector<8x3xf32> to vector<8x1xf32>
    %254 = arith.addf %252, %253 : vector<8x1xf32>
    %255 = math.tanh %254 : vector<8x1xf32>
    %256 = vector.broadcast %234 : vector<8x1xf32> to vector<8x32xf32>
    %257 = arith.mulf %209, %256 : vector<8x32xf32>
    %cst_77 = arith.constant 1.000000e+00 : f32
    %258 = vector.broadcast %cst_77 : f32 to vector<8x1xf32>
    %259 = arith.subf %258, %234 : vector<8x1xf32>
    %260 = arith.mulf %259, %255 : vector<8x1xf32>
    %261 = vector.broadcast %260 : vector<8x1xf32> to vector<8x32xf32>
    %262 = arith.addf %257, %261 : vector<8x32xf32>
    %c0_78 = arith.constant 0 : index
    %c0_79 = arith.constant 0 : index
    %263 = vector.load %arg5[%c0_78, %c0_79] : memref<8x32xf32, #tpu.memory_space<vmem>>, vector<8x32xf32>
    tpu.vector_store %arg5[%c0_78, %c0_79], %262 {strides = array<i32>} : memref<8x32xf32, #tpu.memory_space<vmem>>, vector<8x32xf32>,
    %c1_i32 = arith.constant 1 : i32
    %264 = arith.cmpi eq, %arg0, %c1_i32 : i32
    %265 = arith.extui %264 : i1 to i32
    %c0_i32_80 = arith.constant 0 : i32
    %266 = arith.cmpi ne, %265, %c0_i32_80 : i32
    scf.if %266 {
      %c0_81 = arith.constant 0 : index
      %c0_82 = arith.constant 0 : index
      %267 = vector.load %arg4[%c0_81, %c0_82] : memref<8x32xf32, #tpu.memory_space<vmem>>, vector<8x32xf32>
      tpu.vector_store %arg4[%c0_81, %c0_82], %262 {strides = array<i32>} : memref<8x32xf32, #tpu.memory_space<vmem>>, vector<8x32xf32>,
      %c400 = arith.constant 400 : index
      %c0_83 = arith.constant 0 : index
      %268 = vector.load %arg2[%c400, %c0_83] : memref<480x128xf32, #tpu.memory_space<vmem>>, vector<32x1xf32>
      %c432 = arith.constant 432 : index
      %c0_84 = arith.constant 0 : index
      %269 = vector.load %arg2[%c432, %c0_84] : memref<480x128xf32, #tpu.memory_space<vmem>>, vector<1x1xf32>
      %c440 = arith.constant 440 : index
      %c0_85 = arith.constant 0 : index
      %270 = vector.load %arg2[%c440, %c0_85] : memref<480x128xf32, #tpu.memory_space<vmem>>, vector<1x16xf32>
      %c448 = arith.constant 448 : index
      %c0_86 = arith.constant 0 : index
      %271 = vector.load %arg2[%c448, %c0_86] : memref<480x128xf32, #tpu.memory_space<vmem>>, vector<1x16xf32>
      %c456 = arith.constant 456 : index
      %c0_87 = arith.constant 0 : index
      %272 = vector.load %arg2[%c456, %c0_87] : memref<480x128xf32, #tpu.memory_space<vmem>>, vector<16x1xf32>
      %c472 = arith.constant 472 : index
      %c0_88 = arith.constant 0 : index
      %273 = vector.load %arg2[%c472, %c0_88] : memref<480x128xf32, #tpu.memory_space<vmem>>, vector<1x1xf32>
      %cst_89 = arith.constant dense<0.000000e+00> : vector<8x1xf32>
      %274 = tpu.matmul %262, %268, %cst_89 {dimension_numbers = #tpu.dot_dimension_numbers<[1], [0], [0], [1], [0, 0, 1, 1], [], []>} : vector<8x32xf32>, vector<32x1xf32>, vector<8x1xf32> -> vector<8x1xf32>
      %275 = vector.broadcast %269 : vector<1x1xf32> to vector<8x1xf32>
      %276 = arith.addf %274, %275 : vector<8x1xf32>
      %cst_90 = arith.constant 0.000000e+00 : f32
      %277 = vector.broadcast %cst_90 : f32 to vector<8x1xf32>
      %278 = arith.maximumf %276, %277 : vector<8x1xf32>
      %279 = vector.broadcast %278 : vector<8x1xf32> to vector<8x16xf32>
      %280 = vector.broadcast %270 : vector<1x16xf32> to vector<8x16xf32>
      %281 = arith.mulf %279, %280 : vector<8x16xf32>
      %282 = vector.broadcast %271 : vector<1x16xf32> to vector<8x16xf32>
      %283 = arith.addf %281, %282 : vector<8x16xf32>
      %cst_91 = arith.constant 0.000000e+00 : f32
      %284 = vector.broadcast %cst_91 : f32 to vector<8x16xf32>
      %285 = arith.maximumf %283, %284 : vector<8x16xf32>
      %cst_92 = arith.constant dense<0.000000e+00> : vector<8x1xf32>
      %286 = tpu.matmul %285, %272, %cst_92 {dimension_numbers = #tpu.dot_dimension_numbers<[1], [0], [0], [1], [0, 0, 1, 1], [], []>} : vector<8x16xf32>, vector<16x1xf32>, vector<8x1xf32> -> vector<8x1xf32>
      %287 = vector.broadcast %273 : vector<1x1xf32> to vector<8x1xf32>
      %288 = arith.addf %286, %287 : vector<8x1xf32>
      %289 = arith.negf %288 : vector<8x1xf32>
      %290 = math.exp %289 : vector<8x1xf32>
      %cst_93 = arith.constant 1.000000e+00 : f32
      %291 = vector.broadcast %cst_93 : f32 to vector<8x1xf32>
      %292 = arith.addf %291, %290 : vector<8x1xf32>
      %293 = arith.divf %291, %292 : vector<8x1xf32>
      %294 = arith.negf %293 : vector<8x1xf32>
      %295 = math.exp %294 : vector<8x1xf32>
      %cst_94 = arith.constant 1.000000e+00 : f32
      %296 = vector.broadcast %cst_94 : f32 to vector<8x1xf32>
      %297 = arith.addf %296, %295 : vector<8x1xf32>
      %298 = arith.divf %296, %297 : vector<8x1xf32>
      %c0_95 = arith.constant 0 : index
      %c0_96 = arith.constant 0 : index
      %299 = vector.load %arg3[%c0_95, %c0_96] : memref<8x1xf32, #tpu.memory_space<vmem>>, vector<8x1xf32>
      tpu.vector_store %arg3[%c0_95, %c0_96], %298 {strides = array<i32>} : memref<8x1xf32, #tpu.memory_space<vmem>>, vector<8x1xf32>,
    } else {
    }
    return
  }
  func.func @transform_0(%arg0: i32) -> (i32, i32) {
    %c0_i32 = arith.constant 0 : i32
    %c0_i32_0 = arith.constant 0 : i32
    return %arg0, %c0_i32 : i32, i32
  }
  func.func @transform_1(%arg0: i32) -> (i32, i32) {
    %c0_i32 = arith.constant 0 : i32
    %c0_i32_0 = arith.constant 0 : i32
    %c0_i32_1 = arith.constant 0 : i32
    return %c0_i32, %c0_i32_0 : i32, i32
  }
  func.func @transform_2(%arg0: i32) -> (i32, i32) {
    %c0_i32 = arith.constant 0 : i32
    %c0_i32_0 = arith.constant 0 : i32
    %c0_i32_1 = arith.constant 0 : i32
    return %c0_i32, %c0_i32_0 : i32, i32
  }
  func.func @transform_3(%arg0: i32) -> (i32, i32) {
    %c0_i32 = arith.constant 0 : i32
    %c0_i32_0 = arith.constant 0 : i32
    %c0_i32_1 = arith.constant 0 : i32
    return %c0_i32, %c0_i32_0 : i32, i32
  }
}

</mosaic_0001>

<llo_original>
// kernel: tpu_custom_call.1
$region0: #{tpu_custom_call.1}
  #allocation0 [shape = 'u32[]', space=smem, size = 0x4, offset = 0x4, fixed_abs, tag = 'smem constant byte address 0x4 - core index']
  #allocation1 [shape = 'u32[72,128]{1,0:T(1,128)}', space=vmem, size = 0x9000, scoped, tag = 'internal scratch']
  #allocation2 [shape = 'f32[8,32]{1,0:T(8,128)}', space=vmem, size = 0x1000, scoped, tag = 'scratch operand']
  %s0 = inlined_call_operand.vmem [shape: f32[64,16], index: 0, kind: input, shape index: {}]
  %s1 = inlined_call_operand.hbm [shape: f32[480,128], index: 1, kind: input, shape index: {}]
  %s2 = inlined_call_operand.vmem [shape: f32[8,1], index: 2, kind: output, shape index: {0}]
  %s3 = inlined_call_operand.hbm [shape: f32[8,32], index: 3, kind: output, shape index: {1}]
  %4 = xla_tuple %s2, %s3
  %s5 = sld [smem:[#allocation0]]
  $region61: #{tpu_custom_call.1} parent=0
    _
  %s7 = ssub.s32 1, %s5
  %s8 = scalar_select 0, %s7, %s5
  $region1: #{tpu_custom_call.1} parent=0
    #allocation3 [shape = 'u8[245760]{0}', space=vmem, size = 0x3c000, scoped, tag = 'input window, operand 1, single buffered']
    #allocation4 [shape = 's32[2]{0}', space=sflag, size = 0x8, scoped, tag = 'scoped memory for tpu_custom_call.1']
    #allocation5 [shape = 's32[2]{0}', space=sflag, size = 0x8, scoped, tag = 'scoped memory for tpu_custom_call.1']
    #allocation6 [shape = 'u8[4096]{0}', space=vmem, size = 0x1000, scoped, tag = 'output window, operand 1, single buffered']
    %9 = vsyncpa [#allocation4], 0
    %10 = vsyncpa [#allocation5], 0
    loop: start=0, step=1, limit=4
    $region2: #{tpu_custom_call.1} parent=1 // loop_pre_header
      _
    $region3: #{tpu_custom_call.1} parent=1 // loop_header
      %s12 = sphi 0, %s16
      %p13 = scmp.ge.s32.totalorder %s12, 4
      %s22 = sphi 0, %s24
      %s25 = sphi 0, %s22
      %s26 = sphi 0, %s25
      %s42 = sphi 0, %s26
      %s46 = sphi 0, %s46
      %s48 = sphi 0, %s46
      %s49 = sphi 0, %s48
      %s63 = sphi 0, %s49
      %s67 = sphi 0, %s67
      %s69 = sphi 0, %s67
      %s70 = sphi 0, %s69
      %s84 = sphi 0, %s70
      %s88 = sphi 0, %s88
      %s90 = sphi 0, %s88
      %s91 = sphi 0, %s90
      %s105 = sphi 0, %s91
    $region4: #{tpu_custom_call.1} parent=1 // loop_header_branch
      %15 = sbr.rel (%p13) target = $region8
    $region5: #{tpu_custom_call.1} parent=1 // loop_body
      %s17 = ssub.s32 %s12, 1
      %s18 = ssub.s32 %s12, 2
      %s19 = sadd.s32 %s12, 1
      %s20 = ssub.s32 %s12, %s19
      %p21 = scmp.eq.s32.totalorder %s20, 0
      %s23 = sadd.s32 %s22, 1
      %s24 = scalar_select %p21, %s22, %s23
      %p27 = pneg %p21
      %p28 = scmp.eq.s32.totalorder %s12, 1
      %p29 = por %p27, %p28
      %p30 = scmp.ne.s32.totalorder %s22, %s25
      %p31 = scmp.eq.s32.totalorder %s12, 0
      %p32 = por %p30, %p31
      %p33 = scmp.ne.s32.totalorder %s22, %s25
      %p34 = scmp.eq.s32.totalorder %s17, 1
      %p35 = por %p33, %p34
      %p36 = scmp.ne.s32.totalorder %s25, %s26
      %p37 = scmp.eq.s32.totalorder %s17, 0
      %p38 = por %p36, %p37
      %p39 = scmp.ne.s32.totalorder %s25, %s26
      %p40 = scmp.eq.s32.totalorder %s18, 1
      %p41 = por %p39, %p40
      %p43 = scmp.ne.s32.totalorder %s26, %s42
      %p44 = scmp.eq.s32.totalorder %s18, 0
      %p45 = por %p43, %p44
      %s47 = sadd.s32 %s46, 1
      %p50 = scmp.eq.s32.totalorder %s12, 1
      %p51 = scmp.ne.s32.totalorder %s46, %s48
      %p52 = scmp.eq.s32.totalorder %s12, 0
      %p53 = por %p51, %p52
      %p54 = scmp.ne.s32.totalorder %s46, %s48
      %p55 = scmp.eq.s32.totalorder %s17, 1
      %p56 = por %p54, %p55
      %p57 = scmp.ne.s32.totalorder %s48, %s49
      %p58 = scmp.eq.s32.totalorder %s17, 0
      %p59 = por %p57, %p58
      %p60 = scmp.ne.s32.totalorder %s48, %s49
      %p61 = scmp.eq.s32.totalorder %s18, 1
      %p62 = por %p60, %p61
      %p64 = scmp.ne.s32.totalorder %s49, %s63
      %p65 = scmp.eq.s32.totalorder %s18, 0
      %p66 = por %p64, %p65
      %s68 = sadd.s32 %s67, 1
      %p71 = scmp.eq.s32.totalorder %s12, 1
      %p72 = scmp.ne.s32.totalorder %s67, %s69
      %p73 = scmp.eq.s32.totalorder %s12, 0
      %p74 = por %p72, %p73
      %p75 = scmp.ne.s32.totalorder %s67, %s69
      %p76 = scmp.eq.s32.totalorder %s17, 1
      %p77 = por %p75, %p76
      %p78 = scmp.ne.s32.totalorder %s69, %s70
      %p79 = scmp.eq.s32.totalorder %s17, 0
      %p80 = por %p78, %p79
      %p81 = scmp.ne.s32.totalorder %s69, %s70
      %p82 = scmp.eq.s32.totalorder %s18, 1
      %p83 = por %p81, %p82
      %p85 = scmp.ne.s32.totalorder %s70, %s84
      %p86 = scmp.eq.s32.totalorder %s18, 0
      %p87 = por %p85, %p86
      %s89 = sadd.s32 %s88, 1
      %p92 = scmp.eq.s32.totalorder %s12, 1
      %p93 = scmp.ne.s32.totalorder %s88, %s90
      %p94 = scmp.eq.s32.totalorder %s12, 0
      %p95 = por %p93, %p94
      %p96 = scmp.ne.s32.totalorder %s88, %s90
      %p97 = scmp.eq.s32.totalorder %s17, 1
      %p98 = por %p96, %p97
      %p99 = scmp.ne.s32.totalorder %s90, %s91
      %p100 = scmp.eq.s32.totalorder %s17, 0
      %p101 = por %p99, %p100
      %p102 = scmp.ne.s32.totalorder %s90, %s91
      %p103 = scmp.eq.s32.totalorder %s18, 1
      %p104 = por %p102, %p103
      %p106 = scmp.ne.s32.totalorder %s91, %s105
      %p107 = scmp.eq.s32.totalorder %s18, 0
      %p108 = por %p106, %p107
      %p109 = scmp.le.s32.totalorder 1, %s12
      %p110 = scmp.lt.s32.totalorder %s12, 3
      %p111 = pnand %p109, %p110
      %p112 = pneg %p111
      // Predicated region
      $region9: #{tpu_custom_call.1} parent=5 // pred_check
        _
      $region10: #{tpu_custom_call.1} parent=5 // pred_check_branch
        %114 = sbr.rel (%p111) target = $region12
      $region11: #{tpu_custom_call.1} parent=5 // pred_region
        %s115 = ssub.s32 %s12, 1
        // Predicated region
        $region13: #{tpu_custom_call.1} parent=11 // pred_check
          %p116 = pneg %p59
        $region14: #{tpu_custom_call.1} parent=11 // pred_check_branch
          %118 = sbr.rel (%p116) target = $region16
        $region15: #{tpu_custom_call.1} parent=11 // pred_region
          %120 = vsyncadd [#allocation4], 0
          %s121 = sshll.u32 %s1, 4
          %s122 = int_to_ptr.hbm [resolvable:$true] %s121
          %s123 = sshll.u32 [#allocation3], 4
          %s124 = int_to_ptr.vmem [resolvable:$true] %s123
          %129 = dma.hbm_to_vmem [thread:$0]  %s122, 7680, %s124, [#allocation4], 128, 128, 8
        $region16: #{tpu_custom_call.1} parent=11 // pred_fallthru
          _
      $region12: #{tpu_custom_call.1} parent=5 // pred_fallthru
        _
      %p130 = scmp.lt.s32.totalorder %s12, 2
      // Predicated region
      $region17: #{tpu_custom_call.1} parent=5 // pred_check
        %p131 = pneg %p130
      $region18: #{tpu_custom_call.1} parent=5 // pred_check_branch
        %133 = sbr.rel (%p131) target = $region20
      $region19: #{tpu_custom_call.1} parent=5 // pred_region
        // Predicated region
        $region21: #{tpu_custom_call.1} parent=19 // pred_check
          %p134 = pneg %p32
        $region22: #{tpu_custom_call.1} parent=19 // pred_check_branch
          %136 = sbr.rel (%p134) target = $region24
        $region23: #{tpu_custom_call.1} parent=19 // pred_region
          %s137 = smul.u32 4, %s12
          %p138 = scmp.lt.s32.totalorder %s137, 7
          %s139 = scalar_select %p138, %s137, 7
          %s140 = smul.addr %s139, 8
          %s141 = scalar_lea.vmem %s0, %s140
          %s142 = smul.u32 4, %s12
        $region24: #{tpu_custom_call.1} parent=19 // pred_fallthru
          _
      $region20: #{tpu_custom_call.1} parent=5 // pred_fallthru
        _
      %p143 = scmp.le.s32.totalorder 1, %s12
      %p144 = scmp.lt.s32.totalorder %s12, 3
      %p145 = pnand %p143, %p144
      %p146 = pneg %p145
      // Predicated region
      $region25: #{tpu_custom_call.1} parent=5 // pred_check
        _
      $region26: #{tpu_custom_call.1} parent=5 // pred_check_branch
        %148 = sbr.rel (%p145) target = $region28
      $region27: #{tpu_custom_call.1} parent=5 // pred_region
        %s149 = ssub.s32 %s12, 1
        // Predicated region
        $region29: #{tpu_custom_call.1} parent=27 // pred_check
          %p150 = pneg %p59
        $region30: #{tpu_custom_call.1} parent=27 // pred_check_branch
          %152 = sbr.rel (%p150) target = $region32
        $region31: #{tpu_custom_call.1} parent=27 // pred_region
          %154 = dma.done [#allocation4], 7680
        $region32: #{tpu_custom_call.1} parent=27 // pred_fallthru
          _
        %s155 = smul.u32 4, %s17
        %p156 = scmp.lt.s32.totalorder %s155, 7
        %s157 = scalar_select %p156, %s155, 7
        %s158 = smul.addr %s157, 8
        %s159 = scalar_lea.vmem %s0, %s158
        %p160 = pneg %p38
        %p161 = pneg %p35
        %p162 = pneg %p59
        %p163 = pneg %p56
        %p164 = pneg %p80
        %p165 = pneg %p77
        %p166 = pneg %p101
        %p167 = pneg %p98
        %s168 = smul.u32 4, %s17
        %p169 = scmp.lt.s32.totalorder %s168, 7
        %s170 = scalar_select %p169, %s168, 7
        %s171 = smul.addr %s170, 8
        %s172 = scalar_lea.vmem %s0, %s171
        %s173 = smul.u32 4, %s17
        %p174 = scmp.eq.s32.totalorder %s17, 0
        // Predicated region
        $region33: #{tpu_custom_call.1} parent=27 // pred_check
          %p175 = pneg %p174
        $region34: #{tpu_custom_call.1} parent=27 // pred_check_branch
          %177 = sbr.rel (%p175) target = $region36
        $region35: #{tpu_custom_call.1} parent=27 // pred_region
          %vm178 = vcmask 261120
          %179 = vst.msk [vmem:[#allocation2] sm:$0xff] %vm178, 0.0
        $region36: #{tpu_custom_call.1} parent=27 // pred_fallthru
          _
        %v180 = vld [vmem:[#allocation3] sm:$0xff]
        %v181 = vld [vmem:[#allocation3 + $0x8] sm:$0xff]
        %v182 = vld [vmem:[#allocation3 + $0x10] sm:$0x1]
        %v183 = vld [vmem:[#allocation3 + $0x18] sm:$0xff]
        %v184 = vld [vmem:[#allocation3 + $0x20] sm:$0xff]
        %v185 = vld [vmem:[#allocation3 + $0x28] sm:$0xff]
        %v186 = vld [vmem:[#allocation3 + $0x30] sm:$0xff]
        %v187 = vld [vmem:[#allocation3 + $0x38] sm:$0xff]
        %v188 = vld [vmem:[#allocation3 + $0x40] sm:$0xff]
        %v189 = vld [vmem:[#allocation3 + $0x48] sm:$0xff]
        %v190 = vld [vmem:[#allocation3 + $0x50] sm:$0xff]
        %v191 = vld [vmem:[#allocation3 + $0x58] sm:$0xff]
        %v192 = vld [vmem:[#allocation3 + $0x60] sm:$0xff]
        %v193 = vld [vmem:[#allocation3 + $0x68] sm:$0xff]
        %v194 = vld [vmem:[#allocation3 + $0x70] sm:$0xff]
        %v195 = vld [vmem:[#allocation3 + $0x78] sm:$0x1]
        %v196 = vld [vmem:[#allocation3 + $0x80] sm:$0xff]
        %v197 = vld [vmem:[#allocation3 + $0x88] sm:$0xff]
        %v198 = vld [vmem:[#allocation3 + $0x90] sm:$0xff]
        %v199 = vld [vmem:[#allocation3 + $0x98] sm:$0xff]
        %v200 = vld [vmem:[#allocation3 + $0xa0] sm:$0xff]
        %v201 = vld [vmem:[#allocation3 + $0xa8] sm:$0xff]
        %v202 = vld [vmem:[#allocation3 + $0xb0] sm:$0x1]
        %v203 = vld [vmem:[#allocation3 + $0xb8] sm:$0xff]
        %v204 = vld [vmem:[#allocation3 + $0xc0] sm:$0xff]
        %v205 = vld [vmem:[#allocation3 + $0xc8] sm:$0xff]
        %v206 = vld [vmem:[#allocation3 + $0xd0] sm:$0xff]
        %v207 = vld [vmem:[#allocation3 + $0xd8] sm:$0x1]
        %v208 = vperm.slane %v207, 0
        %v209 = vld [vmem:[#allocation3 + $0xe0] sm:$0xff]
        %v210 = vld [vmem:[#allocation3 + $0xe8] sm:$0xff]
        %v211 = vld [vmem:[#allocation3 + $0xf0] sm:$0xff]
        %v212 = vld [vmem:[#allocation3 + $0xf8] sm:$0xff]
        %v213 = vld [vmem:[#allocation3 + $0x100] sm:$0xff]
        %v214 = vld [vmem:[#allocation3 + $0x108] sm:$0xff]
        %v215 = vld [vmem:[#allocation3 + $0x110] sm:$0xff]
        %v216 = vld [vmem:[#allocation3 + $0x118] sm:$0xff]
        %v217 = vld [vmem:[#allocation3 + $0x120] sm:$0x1]
        %v218 = vperm.slane %v217, 0
        %v219 = vld [vmem:[#allocation3 + $0x128] sm:$0xff]
        %v220 = vld [vmem:[#allocation3 + $0x130] sm:$0xff]
        %v221 = vld [vmem:[#allocation3 + $0x138] sm:$0xff]
        %v222 = vld [vmem:[#allocation3 + $0x140] sm:$0xff]
        %v223 = vld [vmem:[#allocation3 + $0x148] sm:$0x1]
        %v224 = vperm.slane %v223, 0
        %v225 = vld [vmem:[#allocation3 + $0x150] sm:$0xff]
        %v226 = vld [vmem:[#allocation3 + $0x158] sm:$0xff]
        %v227 = vld [vmem:[#allocation3 + $0x160] sm:$0xff]
        %v228 = vld [vmem:[#allocation3 + $0x168] sm:$0xff]
        %v229 = vld [vmem:[#allocation3 + $0x170] sm:$0x1]
        %v230 = vperm.slane %v229, 0
        %v231 = vld [vmem:[#allocation3 + $0x178] sm:$0xff]
        %v232 = vld [vmem:[#allocation3 + $0x180] sm:$0xff]
        %v233 = vld [vmem:[#allocation3 + $0x188] sm:$0x1]
        %v234 = vperm.slane %v233, 0
        %v235 = vld [vmem:[%s172] sm:$0xff]
        %v236 = vld [vmem:[%s172 + $0x8] sm:$0xff]
        %v237 = vld [vmem:[%s172 + $0x10] sm:$0xff]
        %v238 = vld [vmem:[%s172 + $0x18] sm:$0xff]
        %v239 = vperm.slane %v182, 0
        %vm240 = vcmask 130048
        %v242 = vsel %vm240, %v235, 0
        %v245 = vsel %vm240, %v236, 0
        %v248 = vsel %vm240, %v237, 0
        %v251 = vsel %vm240, %v238, 0
        %253 = vmatpush.msra.mxu0 0.0
        %254 = vmatpush.msra.mxu0 0.0
        %255 = vmatpush.msra.mxu0 0.0
        %256 = vmatpush.msra.mxu0 0.0
        %257 = vmatpush.msra.mxu0 0.0
        %258 = vmatpush.msra.mxu0 0.0
        %259 = vmatpush.msra.mxu0 0.0
        %260 = vmatpush.msra.mxu0 0.0
        %261 = vmatpush.msra.mxu0 0.0
        %262 = vmatpush.msra.mxu0 0.0
        %263 = vmatpush.msra.mxu0 0.0
        %264 = vmatpush.msra.mxu0 0.0
        %265 = vmatpush.msra.mxu0 0.0
        %266 = vmatpush.msra.mxu0 0.0
        %267 = vmatpush.msra.mxu0 %v181
        %268 = vmatpush.msra.mxu0 %v180
        %269 = vmatmul.f32.gmra.mxu0 %v242
        %v270 = vpop.f32.mrf.mxu0
        %v271 = vadd.f32 %v239, %v270
        %272 = vmatmul.f32.gmra.mxu0 %v245
        %v273 = vpop.f32.mrf.mxu0
        %v274 = vadd.f32 %v239, %v273
        %275 = vmatmul.f32.gmra.mxu0 %v248
        %v276 = vpop.f32.mrf.mxu0
        %v277 = vadd.f32 %v239, %v276
        %278 = vmatmul.f32.gmra.mxu0 %v251
        %v279 = vpop.f32.mrf.mxu0
        %v280 = vadd.f32 %v239, %v279
        %281 = vdwg.mxu0
        %v282 = vmax.f32 %v271, 0.0
        %v283 = vmax.f32 %v274, 0.0
        %v284 = vmax.f32 %v277, 0.0
        %v285 = vmax.f32 %v280, 0.0
        %v286 = vperm.slane %v195, 0
        %vm287 = vcmask 785408
        %v289 = vsel %vm287, %v282, 0
        %v292 = vsel %vm287, %v283, 0
        %v295 = vsel %vm287, %v284, 0
        %v298 = vsel %vm287, %v285, 0
        %300 = vmatpush.msra.mxu0 0.0
        %301 = vmatpush.msra.mxu0 0.0
        %302 = vmatpush.msra.mxu0 0.0
        %303 = vmatpush.msra.mxu0 0.0
        %304 = vmatpush.msra.mxu0 %v194
        %305 = vmatpush.msra.mxu0 %v193
        %306 = vmatpush.msra.mxu0 %v192
        %307 = vmatpush.msra.mxu0 %v191
        %308 = vmatpush.msra.mxu0 %v190
        %309 = vmatpush.msra.mxu0 %v189
        %310 = vmatpush.msra.mxu0 %v188
        %311 = vmatpush.msra.mxu0 %v187
        %312 = vmatpush.msra.mxu0 %v186
        %313 = vmatpush.msra.mxu0 %v185
        %314 = vmatpush.msra.mxu0 %v184
        %315 = vmatpush.msra.mxu0 %v183
        %316 = vmatmul.f32.gmra.mxu0 %v289
        %v317 = vpop.f32.mrf.mxu0
        %v318 = vadd.f32 %v286, %v317
        %319 = vmatmul.f32.gmra.mxu0 %v292
        %v320 = vpop.f32.mrf.mxu0
        %v321 = vadd.f32 %v286, %v320
        %322 = vmatmul.f32.gmra.mxu0 %v295
        %v323 = vpop.f32.mrf.mxu0
        %v324 = vadd.f32 %v286, %v323
        %325 = vmatmul.f32.gmra.mxu0 %v298
        %v326 = vpop.f32.mrf.mxu0
        %v327 = vadd.f32 %v286, %v326
        %328 = vdwg.mxu0
        %v329 = vmax.f32 %v318, 0.0
        %v330 = vmax.f32 %v321, 0.0
        %v331 = vmax.f32 %v324, 0.0
        %v332 = vmax.f32 %v327, 0.0
        %v333 = vperm.slane %v202, 0
        %vm334 = vcmask 392192
        %v336 = vsel %vm334, %v329, 0
        %v339 = vsel %vm334, %v330, 0
        %v342 = vsel %vm334, %v331, 0
        %v345 = vsel %vm334, %v332, 0
        %347 = vmatpush.msra.mxu0 0.0
        %348 = vmatpush.msra.mxu0 0.0
        %349 = vmatpush.msra.mxu0 0.0
        %350 = vmatpush.msra.mxu0 0.0
        %351 = vmatpush.msra.mxu0 0.0
        %352 = vmatpush.msra.mxu0 0.0
        %353 = vmatpush.msra.mxu0 0.0
        %354 = vmatpush.msra.mxu0 0.0
        %355 = vmatpush.msra.mxu0 0.0
        %356 = vmatpush.msra.mxu0 0.0
        %357 = vmatpush.msra.mxu0 %v201
        %358 = vmatpush.msra.mxu0 %v200
        %359 = vmatpush.msra.mxu0 %v199
        %360 = vmatpush.msra.mxu0 %v198
        %361 = vmatpush.msra.mxu0 %v197
        %362 = vmatpush.msra.mxu0 %v196
        %363 = vmatmul.f32.gmra.mxu0 %v336
        %v364 = vpop.f32.mrf.mxu0
        %v365 = vadd.f32 %v333, %v364
        %366 = vmatmul.f32.gmra.mxu0 %v339
        %v367 = vpop.f32.mrf.mxu0
        %v368 = vadd.f32 %v333, %v367
        %369 = vmatmul.f32.gmra.mxu0 %v342
        %v370 = vpop.f32.mrf.mxu0
        %v371 = vadd.f32 %v333, %v370
        %372 = vmatmul.f32.gmra.mxu0 %v345
        %v373 = vpop.f32.mrf.mxu0
        %v374 = vadd.f32 %v333, %v373
        %375 = vdwg.mxu0
        %v376 = vxor.u32 %v365, 2147483648
        %v377 = vxor.u32 %v368, 2147483648
        %v378 = vxor.u32 %v371, 2147483648
        %v379 = vxor.u32 %v374, 2147483648
        %v380 = vmul.f32 %v376, 1.442695
        %v381 = vpow.pop %v380
        %v382 = vmul.f32 %v377, 1.442695
        %v383 = vpow.pop %v382
        %v384 = vmul.f32 %v378, 1.442695
        %v385 = vpow.pop %v384
        %v386 = vmul.f32 %v379, 1.442695
        %v387 = vpow.pop %v386
        %v388 = vadd.f32 %v381, 1.0
        %v389 = vadd.f32 %v383, 1.0
        %v390 = vadd.f32 %v385, 1.0
        %v391 = vadd.f32 %v387, 1.0
        %v392 = vrcp.pop %v388
        %v393 = vmul.f32 %v388, %v392
        %v394 = vsub.f32 1.0, %v393
        %v395 = vmul.f32 %v392, %v394
        %v396 = vadd.f32 %v392, %v395
        %vm397 = vweird.f32 %v388
        %vm398 = vweird.f32 %v392
        %vm399 = vmor %vm397, %vm398
        %v400 = vsel %vm399, %v392, %v396
        %v401 = vand.u32 2147483647, %v388
        %vm402 = vcmp.eq.f32.partialorder %v401, 8.507059e+37
        %v403 = vand.u32 %v388, 2147483648
        %v404 = vor.u32 1.1754944e-38, %v403
        %v405 = vsel %vm402, %v404, %v400
        %v406 = vmul.f32 1.0, %v405
        %v407 = vrcp.pop %v389
        %v408 = vmul.f32 %v389, %v407
        %v409 = vsub.f32 1.0, %v408
        %v410 = vmul.f32 %v407, %v409
        %v411 = vadd.f32 %v407, %v410
        %vm412 = vweird.f32 %v389
        %vm413 = vweird.f32 %v407
        %vm414 = vmor %vm412, %vm413
        %v415 = vsel %vm414, %v407, %v411
        %v416 = vand.u32 2147483647, %v389
        %vm417 = vcmp.eq.f32.partialorder %v416, 8.507059e+37
        %v418 = vand.u32 %v389, 2147483648
        %v419 = vor.u32 1.1754944e-38, %v418
        %v420 = vsel %vm417, %v419, %v415
        %v421 = vmul.f32 1.0, %v420
        %v422 = vrcp.pop %v390
        %v423 = vmul.f32 %v390, %v422
        %v424 = vsub.f32 1.0, %v423
        %v425 = vmul.f32 %v422, %v424
        %v426 = vadd.f32 %v422, %v425
        %vm427 = vweird.f32 %v390
        %vm428 = vweird.f32 %v422
        %vm429 = vmor %vm427, %vm428
        %v430 = vsel %vm429, %v422, %v426
        %v431 = vand.u32 2147483647, %v390
        %vm432 = vcmp.eq.f32.partialorder %v431, 8.507059e+37
        %v433 = vand.u32 %v390, 2147483648
        %v434 = vor.u32 1.1754944e-38, %v433
        %v435 = vsel %vm432, %v434, %v430
        %v436 = vmul.f32 1.0, %v435
        %v437 = vrcp.pop %v391
        %v438 = vmul.f32 %v391, %v437
        %v439 = vsub.f32 1.0, %v438
        %v440 = vmul.f32 %v437, %v439
        %v441 = vadd.f32 %v437, %v440
        %vm442 = vweird.f32 %v391
        %vm443 = vweird.f32 %v437
        %vm444 = vmor %vm442, %vm443
        %v445 = vsel %vm444, %v437, %v441
        %v446 = vand.u32 2147483647, %v391
        %vm447 = vcmp.eq.f32.partialorder %v446, 8.507059e+37
        %v448 = vand.u32 %v391, 2147483648
        %v449 = vor.u32 1.1754944e-38, %v448
        %v450 = vsel %vm447, %v449, %v445
        %v451 = vmul.f32 1.0, %v450
        %v452 = vld [vmem:[#allocation2] sm:$0xff]
        %vm453 = vcmask 261120
        %v455 = vsel %vm453, %v452, 0
        %457 = vmatpush.msra.mxu0 0.0
        %458 = vmatpush.msra.mxu0 0.0
        %459 = vmatpush.msra.mxu0 0.0
        %460 = vmatpush.msra.mxu0 0.0
        %461 = vmatpush.msra.mxu0 0.0
        %462 = vmatpush.msra.mxu0 0.0
        %463 = vmatpush.msra.mxu0 0.0
        %464 = vmatpush.msra.mxu0 0.0
        %465 = vmatpush.msra.mxu0 0.0
        %466 = vmatpush.msra.mxu0 0.0
        %467 = vmatpush.msra.mxu0 0.0
        %468 = vmatpush.msra.mxu0 0.0
        %469 = vmatpush.msra.mxu0 %v206
        %470 = vmatpush.msra.mxu0 %v205
        %471 = vmatpush.msra.mxu0 %v204
        %472 = vmatpush.msra.mxu0 %v203
        %473 = vmatmul.f32.gmra.mxu0 %v455
        %v474 = vpop.f32.mrf.mxu0
        %v475 = vadd.f32 0.0, %v474
        %476 = vdwg.mxu0
        %v477 = vadd.f32 %v475, %v208
        %v478 = vmax.f32 %v477, 0.0
        %vm479 = vcmask 523264
        %v481 = vsel %vm479, %v478, 0
        %483 = vmatpush.msra.mxu0 0.0
        %484 = vmatpush.msra.mxu0 0.0
        %485 = vmatpush.msra.mxu0 0.0
        %486 = vmatpush.msra.mxu0 0.0
        %487 = vmatpush.msra.mxu0 0.0
        %488 = vmatpush.msra.mxu0 0.0
        %489 = vmatpush.msra.mxu0 0.0
        %490 = vmatpush.msra.mxu0 0.0
        %491 = vmatpush.msra.mxu0 %v216
        %492 = vmatpush.msra.mxu0 %v215
        %493 = vmatpush.msra.mxu0 %v214
        %494 = vmatpush.msra.mxu0 %v213
        %495 = vmatpush.msra.mxu0 %v212
        %496 = vmatpush.msra.mxu0 %v211
        %497 = vmatpush.msra.mxu0 %v210
        %498 = vmatpush.msra.mxu0 %v209
        %499 = vmatmul.f32.gmra.mxu0 %v481
        %v500 = vpop.f32.mrf.mxu0
        %v501 = vadd.f32 %v218, %v500
        %502 = vdwg.mxu0
        %v503 = vmax.f32 %v501, 0.0
        %v505 = vsel %vm453, %v503, 0
        %507 = vmatpush.msra.mxu0 0.0
        %508 = vmatpush.msra.mxu0 0.0
        %509 = vmatpush.msra.mxu0 0.0
        %510 = vmatpush.msra.mxu0 0.0
        %511 = vmatpush.msra.mxu0 0.0
        %512 = vmatpush.msra.mxu0 0.0
        %513 = vmatpush.msra.mxu0 0.0
        %514 = vmatpush.msra.mxu0 0.0
        %515 = vmatpush.msra.mxu0 0.0
        %516 = vmatpush.msra.mxu0 0.0
        %517 = vmatpush.msra.mxu0 0.0
        %518 = vmatpush.msra.mxu0 0.0
        %519 = vmatpush.msra.mxu0 %v222
        %520 = vmatpush.msra.mxu0 %v221
        %521 = vmatpush.msra.mxu0 %v220
        %522 = vmatpush.msra.mxu0 %v219
        %523 = vmatmul.f32.gmra.mxu0 %v505
        %v524 = vpop.f32.mrf.mxu0
        %v525 = vadd.f32 %v224, %v524
        %526 = vdwg.mxu0
        %v527 = vxor.u32 %v525, 2147483648
        %v528 = vmul.f32 %v527, 1.442695
        %v529 = vpow.pop %v528
        %v530 = vadd.f32 %v529, 1.0
        %v531 = vrcp.pop %v530
        %v532 = vmul.f32 %v530, %v531
        %v533 = vsub.f32 1.0, %v532
        %v534 = vmul.f32 %v531, %v533
        %v535 = vadd.f32 %v531, %v534
        %vm536 = vweird.f32 %v530
        %vm537 = vweird.f32 %v531
        %vm538 = vmor %vm536, %vm537
        %v539 = vsel %vm538, %v531, %v535
        %v540 = vand.u32 2147483647, %v530
        %vm541 = vcmp.eq.f32.partialorder %v540, 8.507059e+37
        %v542 = vand.u32 %v530, 2147483648
        %v543 = vor.u32 1.1754944e-38, %v542
        %v544 = vsel %vm541, %v543, %v539
        %v545 = vmul.f32 1.0, %v544
        %v546 = vadd.f32 %v545, %v406
        %v547 = vxor.u32 %v546, 2147483648
        %v548 = vmul.f32 %v547, 1.442695
        %v549 = vpow.pop %v548
        %v550 = vadd.f32 %v549, 1.0
        %v551 = vrcp.pop %v550
        %v552 = vmul.f32 %v550, %v551
        %v553 = vsub.f32 1.0, %v552
        %v554 = vmul.f32 %v551, %v553
        %v555 = vadd.f32 %v551, %v554
        %vm556 = vweird.f32 %v550
        %vm557 = vweird.f32 %v551
        %vm558 = vmor %vm556, %vm557
        %v559 = vsel %vm558, %v551, %v555
        %v560 = vand.u32 2147483647, %v550
        %vm561 = vcmp.eq.f32.partialorder %v560, 8.507059e+37
        %v562 = vand.u32 %v550, 2147483648
        %v563 = vor.u32 1.1754944e-38, %v562
        %v564 = vsel %vm561, %v563, %v559
        %v565 = vmul.f32 1.0, %v564
        %567 = vset.pattern.permute.xlu0 1
        %568 = vperm.xlu0 %567, %v565
        %v569 = vpop.permute.xlu0 %568
        %v571 = vmul.f32 %v569, %v475
        %v572 = vadd.f32 %v571, %v208
        %v573 = vmax.f32 %v572, 0.0
        %575 = vrot.lane.b32.xlu0 %v573, 64
        %v576 = vpop.permute.xlu0 %575
        %v577 = vsel %vm453, %v576, 0
        %579 = vmatpush.msra.mxu0 0.0
        %580 = vmatpush.msra.mxu0 0.0
        %581 = vmatpush.msra.mxu0 0.0
        %582 = vmatpush.msra.mxu0 0.0
        %583 = vmatpush.msra.mxu0 0.0
        %584 = vmatpush.msra.mxu0 0.0
        %585 = vmatpush.msra.mxu0 0.0
        %586 = vmatpush.msra.mxu0 0.0
        %587 = vmatpush.msra.mxu0 0.0
        %588 = vmatpush.msra.mxu0 0.0
        %589 = vmatpush.msra.mxu0 0.0
        %590 = vmatpush.msra.mxu0 0.0
        %591 = vmatpush.msra.mxu0 %v228
        %592 = vmatpush.msra.mxu0 %v227
        %593 = vmatpush.msra.mxu0 %v226
        %594 = vmatpush.msra.mxu0 %v225
        %595 = vmatmul.f32.gmra.mxu0 %v577
        %v596 = vpop.f32.mrf.mxu0
        %v597 = vadd.f32 %v230, %v596
        %598 = vdwg.mxu0
        %v599 = vmax.f32 %v597, 0.0
        %v601 = vsel %vm240, %v599, 0
        %603 = vmatpush.msra.mxu0 0.0
        %604 = vmatpush.msra.mxu0 0.0
        %605 = vmatpush.msra.mxu0 0.0
        %606 = vmatpush.msra.mxu0 0.0
        %607 = vmatpush.msra.mxu0 0.0
        %608 = vmatpush.msra.mxu0 0.0
        %609 = vmatpush.msra.mxu0 0.0
        %610 = vmatpush.msra.mxu0 0.0
        %611 = vmatpush.msra.mxu0 0.0
        %612 = vmatpush.msra.mxu0 0.0
        %613 = vmatpush.msra.mxu0 0.0
        %614 = vmatpush.msra.mxu0 0.0
        %615 = vmatpush.msra.mxu0 0.0
        %616 = vmatpush.msra.mxu0 0.0
        %617 = vmatpush.msra.mxu0 %v232
        %618 = vmatpush.msra.mxu0 %v231
        %619 = vmatmul.f32.gmra.mxu0 %v601
        %v620 = vpop.f32.mrf.mxu0
        %v621 = vadd.f32 %v234, %v620
        %622 = vdwg.mxu0
        %v623 = vxor.u32 %v621, 2147483648
        %v624 = vmul.f32 %v623, 1.442695
        %v625 = vpow.pop %v624
        %v626 = vadd.f32 %v625, 1.0
        %v627 = vrcp.pop %v626
        %v628 = vmul.f32 %v626, %v627
        %v629 = vsub.f32 1.0, %v628
        %v630 = vmul.f32 %v627, %v629
        %v631 = vadd.f32 %v627, %v630
        %vm632 = vweird.f32 %v626
        %vm633 = vweird.f32 %v627
        %vm634 = vmor %vm632, %vm633
        %v635 = vsel %vm634, %v627, %v631
        %v636 = vand.u32 2147483647, %v626
        %vm637 = vcmp.eq.f32.partialorder %v636, 8.507059e+37
        %v638 = vand.u32 %v626, 2147483648
        %v639 = vor.u32 1.1754944e-38, %v638
        %v640 = vsel %vm637, %v639, %v635
        %v641 = vmul.f32 1.0, %v640
        %643 = vrot.lane.b32.xlu0 %v406, 126
        %v644 = vpop.permute.xlu0 %643
        %v646 = vadd.f32 %v641, %v644
        %v647 = vtanh.pop %v646
        %648 = vset.pattern.permute.xlu0 0
        %649 = vperm.xlu0 %648, %v565
        %v650 = vpop.permute.xlu0 %649
        %v652 = vmul.f32 %v452, %v650
        %v653 = vsub.f32 1.0, %v565
        %v654 = vmul.f32 %v653, %v647
        %656 = vset.pattern.permute.xlu0 0
        %657 = vperm.xlu0 %656, %v654
        %v658 = vpop.permute.xlu0 %657
        %v660 = vadd.f32 %v652, %v658
        %v662 = vsel %vm453, %v660, 0
        %664 = vmatpush.msra.mxu0 0.0
        %665 = vmatpush.msra.mxu0 0.0
        %666 = vmatpush.msra.mxu0 0.0
        %667 = vmatpush.msra.mxu0 0.0
        %668 = vmatpush.msra.mxu0 0.0
        %669 = vmatpush.msra.mxu0 0.0
        %670 = vmatpush.msra.mxu0 0.0
        %671 = vmatpush.msra.mxu0 0.0
        %672 = vmatpush.msra.mxu0 0.0
        %673 = vmatpush.msra.mxu0 0.0
        %674 = vmatpush.msra.mxu0 0.0
        %675 = vmatpush.msra.mxu0 0.0
        %676 = vmatpush.msra.mxu0 %v206
        %677 = vmatpush.msra.mxu0 %v205
        %678 = vmatpush.msra.mxu0 %v204
        %679 = vmatpush.msra.mxu0 %v203
        %680 = vmatmul.f32.gmra.mxu0 %v662
        %v681 = vpop.f32.mrf.mxu0
        %v682 = vadd.f32 0.0, %v681
        %683 = vdwg.mxu0
        %v684 = vadd.f32 %v682, %v208
        %v685 = vmax.f32 %v684, 0.0
        %v687 = vsel %vm479, %v685, 0
        %689 = vmatpush.msra.mxu0 0.0
        %690 = vmatpush.msra.mxu0 0.0
        %691 = vmatpush.msra.mxu0 0.0
        %692 = vmatpush.msra.mxu0 0.0
        %693 = vmatpush.msra.mxu0 0.0
        %694 = vmatpush.msra.mxu0 0.0
        %695 = vmatpush.msra.mxu0 0.0
        %696 = vmatpush.msra.mxu0 0.0
        %697 = vmatpush.msra.mxu0 %v216
        %698 = vmatpush.msra.mxu0 %v215
        %699 = vmatpush.msra.mxu0 %v214
        %700 = vmatpush.msra.mxu0 %v213
        %701 = vmatpush.msra.mxu0 %v212
        %702 = vmatpush.msra.mxu0 %v211
        %703 = vmatpush.msra.mxu0 %v210
        %704 = vmatpush.msra.mxu0 %v209
        %705 = vmatmul.f32.gmra.mxu0 %v687
        %v706 = vpop.f32.mrf.mxu0
        %v707 = vadd.f32 %v218, %v706
        %708 = vdwg.mxu0
        %v709 = vmax.f32 %v707, 0.0
        %v711 = vsel %vm453, %v709, 0
        %713 = vmatpush.msra.mxu0 0.0
        %714 = vmatpush.msra.mxu0 0.0
        %715 = vmatpush.msra.mxu0 0.0
        %716 = vmatpush.msra.mxu0 0.0
        %717 = vmatpush.msra.mxu0 0.0
        %718 = vmatpush.msra.mxu0 0.0
        %719 = vmatpush.msra.mxu0 0.0
        %720 = vmatpush.msra.mxu0 0.0
        %721 = vmatpush.msra.mxu0 0.0
        %722 = vmatpush.msra.mxu0 0.0
        %723 = vmatpush.msra.mxu0 0.0
        %724 = vmatpush.msra.mxu0 0.0
        %725 = vmatpush.msra.mxu0 %v222
        %726 = vmatpush.msra.mxu0 %v221
        %727 = vmatpush.msra.mxu0 %v220
        %728 = vmatpush.msra.mxu0 %v219
        %729 = vmatmul.f32.gmra.mxu0 %v711
        %v730 = vpop.f32.mrf.mxu0
        %v731 = vadd.f32 %v224, %v730
        %732 = vdwg.mxu0
        %v733 = vxor.u32 %v731, 2147483648
        %v734 = vmul.f32 %v733, 1.442695
        %v735 = vpow.pop %v734
        %v736 = vadd.f32 %v735, 1.0
        %v737 = vrcp.pop %v736
        %v738 = vmul.f32 %v736, %v737
        %v739 = vsub.f32 1.0, %v738
        %v740 = vmul.f32 %v737, %v739
        %v741 = vadd.f32 %v737, %v740
        %vm742 = vweird.f32 %v736
        %vm743 = vweird.f32 %v737
        %vm744 = vmor %vm742, %vm743
        %v745 = vsel %vm744, %v737, %v741
        %v746 = vand.u32 2147483647, %v736
        %vm747 = vcmp.eq.f32.partialorder %v746, 8.507059e+37
        %v748 = vand.u32 %v736, 2147483648
        %v749 = vor.u32 1.1754944e-38, %v748
        %v750 = vsel %vm747, %v749, %v745
        %v751 = vmul.f32 1.0, %v750
        %v752 = vadd.f32 %v751, %v421
        %v753 = vxor.u32 %v752, 2147483648
        %v754 = vmul.f32 %v753, 1.442695
        %v755 = vpow.pop %v754
        %v756 = vadd.f32 %v755, 1.0
        %v757 = vrcp.pop %v756
        %v758 = vmul.f32 %v756, %v757
        %v759 = vsub.f32 1.0, %v758
        %v760 = vmul.f32 %v757, %v759
        %v761 = vadd.f32 %v757, %v760
        %vm762 = vweird.f32 %v756
        %vm763 = vweird.f32 %v757
        %vm764 = vmor %vm762, %vm763
        %v765 = vsel %vm764, %v757, %v761
        %v766 = vand.u32 2147483647, %v756
        %vm767 = vcmp.eq.f32.partialorder %v766, 8.507059e+37
        %v768 = vand.u32 %v756, 2147483648
        %v769 = vor.u32 1.1754944e-38, %v768
        %v770 = vsel %vm767, %v769, %v765
        %v771 = vmul.f32 1.0, %v770
        %773 = vset.pattern.permute.xlu0 1
        %774 = vperm.xlu0 %773, %v771
        %v775 = vpop.permute.xlu0 %774
        %v777 = vmul.f32 %v775, %v682
        %v778 = vadd.f32 %v777, %v208
        %v779 = vmax.f32 %v778, 0.0
        %781 = vrot.lane.b32.xlu0 %v779, 64
        %v782 = vpop.permute.xlu0 %781
        %v783 = vsel %vm453, %v782, 0
        %785 = vmatpush.msra.mxu0 0.0
        %786 = vmatpush.msra.mxu0 0.0
        %787 = vmatpush.msra.mxu0 0.0
        %788 = vmatpush.msra.mxu0 0.0
        %789 = vmatpush.msra.mxu0 0.0
        %790 = vmatpush.msra.mxu0 0.0
        %791 = vmatpush.msra.mxu0 0.0
        %792 = vmatpush.msra.mxu0 0.0
        %793 = vmatpush.msra.mxu0 0.0
        %794 = vmatpush.msra.mxu0 0.0
        %795 = vmatpush.msra.mxu0 0.0
        %796 = vmatpush.msra.mxu0 0.0
        %797 = vmatpush.msra.mxu0 %v228
        %798 = vmatpush.msra.mxu0 %v227
        %799 = vmatpush.msra.mxu0 %v226
        %800 = vmatpush.msra.mxu0 %v225
        %801 = vmatmul.f32.gmra.mxu0 %v783
        %v802 = vpop.f32.mrf.mxu0
        %v803 = vadd.f32 %v230, %v802
        %804 = vdwg.mxu0
        %v805 = vmax.f32 %v803, 0.0
        %v807 = vsel %vm240, %v805, 0
        %809 = vmatpush.msra.mxu0 0.0
        %810 = vmatpush.msra.mxu0 0.0
        %811 = vmatpush.msra.mxu0 0.0
        %812 = vmatpush.msra.mxu0 0.0
        %813 = vmatpush.msra.mxu0 0.0
        %814 = vmatpush.msra.mxu0 0.0
        %815 = vmatpush.msra.mxu0 0.0
        %816 = vmatpush.msra.mxu0 0.0
        %817 = vmatpush.msra.mxu0 0.0
        %818 = vmatpush.msra.mxu0 0.0
        %819 = vmatpush.msra.mxu0 0.0
        %820 = vmatpush.msra.mxu0 0.0
        %821 = vmatpush.msra.mxu0 0.0
        %822 = vmatpush.msra.mxu0 0.0
        %823 = vmatpush.msra.mxu0 %v232
        %824 = vmatpush.msra.mxu0 %v231
        %825 = vmatmul.f32.gmra.mxu0 %v807
        %v826 = vpop.f32.mrf.mxu0
        %v827 = vadd.f32 %v234, %v826
        %828 = vdwg.mxu0
        %v829 = vxor.u32 %v827, 2147483648
        %v830 = vmul.f32 %v829, 1.442695
        %v831 = vpow.pop %v830
        %v832 = vadd.f32 %v831, 1.0
        %v833 = vrcp.pop %v832
        %v834 = vmul.f32 %v832, %v833
        %v835 = vsub.f32 1.0, %v834
        %v836 = vmul.f32 %v833, %v835
        %v837 = vadd.f32 %v833, %v836
        %vm838 = vweird.f32 %v832
        %vm839 = vweird.f32 %v833
        %vm840 = vmor %vm838, %vm839
        %v841 = vsel %vm840, %v833, %v837
        %v842 = vand.u32 2147483647, %v832
        %vm843 = vcmp.eq.f32.partialorder %v842, 8.507059e+37
        %v844 = vand.u32 %v832, 2147483648
        %v845 = vor.u32 1.1754944e-38, %v844
        %v846 = vsel %vm843, %v845, %v841
        %v847 = vmul.f32 1.0, %v846
        %849 = vrot.lane.b32.xlu0 %v421, 126
        %v850 = vpop.permute.xlu0 %849
        %v852 = vadd.f32 %v847, %v850
        %v853 = vtanh.pop %v852
        %854 = vset.pattern.permute.xlu0 0
        %855 = vperm.xlu0 %854, %v771
        %v856 = vpop.permute.xlu0 %855
        %v858 = vmul.f32 %v660, %v856
        %v859 = vsub.f32 1.0, %v771
        %v860 = vmul.f32 %v859, %v853
        %862 = vset.pattern.permute.xlu0 0
        %863 = vperm.xlu0 %862, %v860
        %v864 = vpop.permute.xlu0 %863
        %v866 = vadd.f32 %v858, %v864
        %v868 = vsel %vm453, %v866, 0
        %870 = vmatpush.msra.mxu0 0.0
        %871 = vmatpush.msra.mxu0 0.0
        %872 = vmatpush.msra.mxu0 0.0
        %873 = vmatpush.msra.mxu0 0.0
        %874 = vmatpush.msra.mxu0 0.0
        %875 = vmatpush.msra.mxu0 0.0
        %876 = vmatpush.msra.mxu0 0.0
        %877 = vmatpush.msra.mxu0 0.0
        %878 = vmatpush.msra.mxu0 0.0
        %879 = vmatpush.msra.mxu0 0.0
        %880 = vmatpush.msra.mxu0 0.0
        %881 = vmatpush.msra.mxu0 0.0
        %882 = vmatpush.msra.mxu0 %v206
        %883 = vmatpush.msra.mxu0 %v205
        %884 = vmatpush.msra.mxu0 %v204
        %885 = vmatpush.msra.mxu0 %v203
        %886 = vmatmul.f32.gmra.mxu0 %v868
        %v887 = vpop.f32.mrf.mxu0
        %v888 = vadd.f32 0.0, %v887
        %889 = vdwg.mxu0
        %v890 = vadd.f32 %v888, %v208
        %v891 = vmax.f32 %v890, 0.0
        %v893 = vsel %vm479, %v891, 0
        %895 = vmatpush.msra.mxu0 0.0
        %896 = vmatpush.msra.mxu0 0.0
        %897 = vmatpush.msra.mxu0 0.0
        %898 = vmatpush.msra.mxu0 0.0
        %899 = vmatpush.msra.mxu0 0.0
        %900 = vmatpush.msra.mxu0 0.0
        %901 = vmatpush.msra.mxu0 0.0
        %902 = vmatpush.msra.mxu0 0.0
        %903 = vmatpush.msra.mxu0 %v216
        %904 = vmatpush.msra.mxu0 %v215
        %905 = vmatpush.msra.mxu0 %v214
        %906 = vmatpush.msra.mxu0 %v213
        %907 = vmatpush.msra.mxu0 %v212
        %908 = vmatpush.msra.mxu0 %v211
        %909 = vmatpush.msra.mxu0 %v210
        %910 = vmatpush.msra.mxu0 %v209
        %911 = vmatmul.f32.gmra.mxu0 %v893
        %v912 = vpop.f32.mrf.mxu0
        %v913 = vadd.f32 %v218, %v912
        %914 = vdwg.mxu0
        %v915 = vmax.f32 %v913, 0.0
        %v917 = vsel %vm453, %v915, 0
        %919 = vmatpush.msra.mxu0 0.0
        %920 = vmatpush.msra.mxu0 0.0
        %921 = vmatpush.msra.mxu0 0.0
        %922 = vmatpush.msra.mxu0 0.0
        %923 = vmatpush.msra.mxu0 0.0
        %924 = vmatpush.msra.mxu0 0.0
        %925 = vmatpush.msra.mxu0 0.0
        %926 = vmatpush.msra.mxu0 0.0
        %927 = vmatpush.msra.mxu0 0.0
        %928 = vmatpush.msra.mxu0 0.0
        %929 = vmatpush.msra.mxu0 0.0
        %930 = vmatpush.msra.mxu0 0.0
        %931 = vmatpush.msra.mxu0 %v222
        %932 = vmatpush.msra.mxu0 %v221
        %933 = vmatpush.msra.mxu0 %v220
        %934 = vmatpush.msra.mxu0 %v219
        %935 = vmatmul.f32.gmra.mxu0 %v917
        %v936 = vpop.f32.mrf.mxu0
        %v937 = vadd.f32 %v224, %v936
        %938 = vdwg.mxu0
        %v939 = vxor.u32 %v937, 2147483648
        %v940 = vmul.f32 %v939, 1.442695
        %v941 = vpow.pop %v940
        %v942 = vadd.f32 %v941, 1.0
        %v943 = vrcp.pop %v942
        %v944 = vmul.f32 %v942, %v943
        %v945 = vsub.f32 1.0, %v944
        %v946 = vmul.f32 %v943, %v945
        %v947 = vadd.f32 %v943, %v946
        %vm948 = vweird.f32 %v942
        %vm949 = vweird.f32 %v943
        %vm950 = vmor %vm948, %vm949
        %v951 = vsel %vm950, %v943, %v947
        %v952 = vand.u32 2147483647, %v942
        %vm953 = vcmp.eq.f32.partialorder %v952, 8.507059e+37
        %v954 = vand.u32 %v942, 2147483648
        %v955 = vor.u32 1.1754944e-38, %v954
        %v956 = vsel %vm953, %v955, %v951
        %v957 = vmul.f32 1.0, %v956
        %v958 = vadd.f32 %v957, %v436
        %v959 = vxor.u32 %v958, 2147483648
        %v960 = vmul.f32 %v959, 1.442695
        %v961 = vpow.pop %v960
        %v962 = vadd.f32 %v961, 1.0
        %v963 = vrcp.pop %v962
        %v964 = vmul.f32 %v962, %v963
        %v965 = vsub.f32 1.0, %v964
        %v966 = vmul.f32 %v963, %v965
        %v967 = vadd.f32 %v963, %v966
        %vm968 = vweird.f32 %v962
        %vm969 = vweird.f32 %v963
        %vm970 = vmor %vm968, %vm969
        %v971 = vsel %vm970, %v963, %v967
        %v972 = vand.u32 2147483647, %v962
        %vm973 = vcmp.eq.f32.partialorder %v972, 8.507059e+37
        %v974 = vand.u32 %v962, 2147483648
        %v975 = vor.u32 1.1754944e-38, %v974
        %v976 = vsel %vm973, %v975, %v971
        %v977 = vmul.f32 1.0, %v976
        %979 = vset.pattern.permute.xlu0 1
        %980 = vperm.xlu0 %979, %v977
        %v981 = vpop.permute.xlu0 %980
        %v983 = vmul.f32 %v981, %v888
        %v984 = vadd.f32 %v983, %v208
        %v985 = vmax.f32 %v984, 0.0
        %987 = vrot.lane.b32.xlu0 %v985, 64
        %v988 = vpop.permute.xlu0 %987
        %v989 = vsel %vm453, %v988, 0
        %991 = vmatpush.msra.mxu0 0.0
        %992 = vmatpush.msra.mxu0 0.0
        %993 = vmatpush.msra.mxu0 0.0
        %994 = vmatpush.msra.mxu0 0.0
        %995 = vmatpush.msra.mxu0 0.0
        %996 = vmatpush.msra.mxu0 0.0
        %997 = vmatpush.msra.mxu0 0.0
        %998 = vmatpush.msra.mxu0 0.0
        %999 = vmatpush.msra.mxu0 0.0
        %1000 = vmatpush.msra.mxu0 0.0
        %1001 = vmatpush.msra.mxu0 0.0
        %1002 = vmatpush.msra.mxu0 0.0
        %1003 = vmatpush.msra.mxu0 %v228
        %1004 = vmatpush.msra.mxu0 %v227
        %1005 = vmatpush.msra.mxu0 %v226
        %1006 = vmatpush.msra.mxu0 %v225
        %1007 = vmatmul.f32.gmra.mxu0 %v989
        %v1008 = vpop.f32.mrf.mxu0
        %v1009 = vadd.f32 %v230, %v1008
        %1010 = vdwg.mxu0
        %v1011 = vmax.f32 %v1009, 0.0
        %v1013 = vsel %vm240, %v1011, 0
        %1015 = vmatpush.msra.mxu0 0.0
        %1016 = vmatpush.msra.mxu0 0.0
        %1017 = vmatpush.msra.mxu0 0.0
        %1018 = vmatpush.msra.mxu0 0.0
        %1019 = vmatpush.msra.mxu0 0.0
        %1020 = vmatpush.msra.mxu0 0.0
        %1021 = vmatpush.msra.mxu0 0.0
        %1022 = vmatpush.msra.mxu0 0.0
        %1023 = vmatpush.msra.mxu0 0.0
        %1024 = vmatpush.msra.mxu0 0.0
        %1025 = vmatpush.msra.mxu0 0.0
        %1026 = vmatpush.msra.mxu0 0.0
        %1027 = vmatpush.msra.mxu0 0.0
        %1028 = vmatpush.msra.mxu0 0.0
        %1029 = vmatpush.msra.mxu0 %v232
        %1030 = vmatpush.msra.mxu0 %v231
        %1031 = vmatmul.f32.gmra.mxu0 %v1013
        %v1032 = vpop.f32.mrf.mxu0
        %v1033 = vadd.f32 %v234, %v1032
        %1034 = vdwg.mxu0
        %v1035 = vxor.u32 %v1033, 2147483648
        %v1036 = vmul.f32 %v1035, 1.442695
        %v1037 = vpow.pop %v1036
        %v1038 = vadd.f32 %v1037, 1.0
        %v1039 = vrcp.pop %v1038
        %v1040 = vmul.f32 %v1038, %v1039
        %v1041 = vsub.f32 1.0, %v1040
        %v1042 = vmul.f32 %v1039, %v1041
        %v1043 = vadd.f32 %v1039, %v1042
        %vm1044 = vweird.f32 %v1038
        %vm1045 = vweird.f32 %v1039
        %vm1046 = vmor %vm1044, %vm1045
        %v1047 = vsel %vm1046, %v1039, %v1043
        %v1048 = vand.u32 2147483647, %v1038
        %vm1049 = vcmp.eq.f32.partialorder %v1048, 8.507059e+37
        %v1050 = vand.u32 %v1038, 2147483648
        %v1051 = vor.u32 1.1754944e-38, %v1050
        %v1052 = vsel %vm1049, %v1051, %v1047
        %v1053 = vmul.f32 1.0, %v1052
        %1055 = vrot.lane.b32.xlu0 %v436, 126
        %v1056 = vpop.permute.xlu0 %1055
        %v1058 = vadd.f32 %v1053, %v1056
        %v1059 = vtanh.pop %v1058
        %1060 = vset.pattern.permute.xlu0 0
        %1061 = vperm.xlu0 %1060, %v977
        %v1062 = vpop.permute.xlu0 %1061
        %v1064 = vmul.f32 %v866, %v1062
        %v1065 = vsub.f32 1.0, %v977
        %v1066 = vmul.f32 %v1065, %v1059
        %1068 = vset.pattern.permute.xlu0 0
        %1069 = vperm.xlu0 %1068, %v1066
        %v1070 = vpop.permute.xlu0 %1069
        %v1072 = vadd.f32 %v1064, %v1070
        %v1074 = vsel %vm453, %v1072, 0
        %1076 = vmatpush.msra.mxu0 0.0
        %1077 = vmatpush.msra.mxu0 0.0
        %1078 = vmatpush.msra.mxu0 0.0
        %1079 = vmatpush.msra.mxu0 0.0
        %1080 = vmatpush.msra.mxu0 0.0
        %1081 = vmatpush.msra.mxu0 0.0
        %1082 = vmatpush.msra.mxu0 0.0
        %1083 = vmatpush.msra.mxu0 0.0
        %1084 = vmatpush.msra.mxu0 0.0
        %1085 = vmatpush.msra.mxu0 0.0
        %1086 = vmatpush.msra.mxu0 0.0
        %1087 = vmatpush.msra.mxu0 0.0
        %1088 = vmatpush.msra.mxu0 %v206
        %1089 = vmatpush.msra.mxu0 %v205
        %1090 = vmatpush.msra.mxu0 %v204
        %1091 = vmatpush.msra.mxu0 %v203
        %1092 = vmatmul.f32.gmra.mxu0 %v1074
        %v1093 = vpop.f32.mrf.mxu0
        %v1094 = vadd.f32 0.0, %v1093
        %1095 = vdwg.mxu0
        %v1096 = vadd.f32 %v1094, %v208
        %v1097 = vmax.f32 %v1096, 0.0
        %v1099 = vsel %vm479, %v1097, 0
        %1101 = vmatpush.msra.mxu0 0.0
        %1102 = vmatpush.msra.mxu0 0.0
        %1103 = vmatpush.msra.mxu0 0.0
        %1104 = vmatpush.msra.mxu0 0.0
        %1105 = vmatpush.msra.mxu0 0.0
        %1106 = vmatpush.msra.mxu0 0.0
        %1107 = vmatpush.msra.mxu0 0.0
        %1108 = vmatpush.msra.mxu0 0.0
        %1109 = vmatpush.msra.mxu0 %v216
        %1110 = vmatpush.msra.mxu0 %v215
        %1111 = vmatpush.msra.mxu0 %v214
        %1112 = vmatpush.msra.mxu0 %v213
        %1113 = vmatpush.msra.mxu0 %v212
        %1114 = vmatpush.msra.mxu0 %v211
        %1115 = vmatpush.msra.mxu0 %v210
        %1116 = vmatpush.msra.mxu0 %v209
        %1117 = vmatmul.f32.gmra.mxu0 %v1099
        %v1118 = vpop.f32.mrf.mxu0
        %v1119 = vadd.f32 %v218, %v1118
        %1120 = vdwg.mxu0
        %v1121 = vmax.f32 %v1119, 0.0
        %v1123 = vsel %vm453, %v1121, 0
        %1125 = vmatpush.msra.mxu0 0.0
        %1126 = vmatpush.msra.mxu0 0.0
        %1127 = vmatpush.msra.mxu0 0.0
        %1128 = vmatpush.msra.mxu0 0.0
        %1129 = vmatpush.msra.mxu0 0.0
        %1130 = vmatpush.msra.mxu0 0.0
        %1131 = vmatpush.msra.mxu0 0.0
        %1132 = vmatpush.msra.mxu0 0.0
        %1133 = vmatpush.msra.mxu0 0.0
        %1134 = vmatpush.msra.mxu0 0.0
        %1135 = vmatpush.msra.mxu0 0.0
        %1136 = vmatpush.msra.mxu0 0.0
        %1137 = vmatpush.msra.mxu0 %v222
        %1138 = vmatpush.msra.mxu0 %v221
        %1139 = vmatpush.msra.mxu0 %v220
        %1140 = vmatpush.msra.mxu0 %v219
        %1141 = vmatmul.f32.gmra.mxu0 %v1123
        %v1142 = vpop.f32.mrf.mxu0
        %v1143 = vadd.f32 %v224, %v1142
        %1144 = vdwg.mxu0
        %v1145 = vxor.u32 %v1143, 2147483648
        %v1146 = vmul.f32 %v1145, 1.442695
        %v1147 = vpow.pop %v1146
        %v1148 = vadd.f32 %v1147, 1.0
        %v1149 = vrcp.pop %v1148
        %v1150 = vmul.f32 %v1148, %v1149
        %v1151 = vsub.f32 1.0, %v1150
        %v1152 = vmul.f32 %v1149, %v1151
        %v1153 = vadd.f32 %v1149, %v1152
        %vm1154 = vweird.f32 %v1148
        %vm1155 = vweird.f32 %v1149
        %vm1156 = vmor %vm1154, %vm1155
        %v1157 = vsel %vm1156, %v1149, %v1153
        %v1158 = vand.u32 2147483647, %v1148
        %vm1159 = vcmp.eq.f32.partialorder %v1158, 8.507059e+37
        %v1160 = vand.u32 %v1148, 2147483648
        %v1161 = vor.u32 1.1754944e-38, %v1160
        %v1162 = vsel %vm1159, %v1161, %v1157
        %v1163 = vmul.f32 1.0, %v1162
        %v1164 = vadd.f32 %v1163, %v451
        %v1165 = vxor.u32 %v1164, 2147483648
        %v1166 = vmul.f32 %v1165, 1.442695
        %v1167 = vpow.pop %v1166
        %v1168 = vadd.f32 %v1167, 1.0
        %v1169 = vrcp.pop %v1168
        %v1170 = vmul.f32 %v1168, %v1169
        %v1171 = vsub.f32 1.0, %v1170
        %v1172 = vmul.f32 %v1169, %v1171
        %v1173 = vadd.f32 %v1169, %v1172
        %vm1174 = vweird.f32 %v1168
        %vm1175 = vweird.f32 %v1169
        %vm1176 = vmor %vm1174, %vm1175
        %v1177 = vsel %vm1176, %v1169, %v1173
        %v1178 = vand.u32 2147483647, %v1168
        %vm1179 = vcmp.eq.f32.partialorder %v1178, 8.507059e+37
        %v1180 = vand.u32 %v1168, 2147483648
        %v1181 = vor.u32 1.1754944e-38, %v1180
        %v1182 = vsel %vm1179, %v1181, %v1177
        %v1183 = vmul.f32 1.0, %v1182
        %1185 = vset.pattern.permute.xlu0 1
        %1186 = vperm.xlu0 %1185, %v1183
        %v1187 = vpop.permute.xlu0 %1186
        %v1189 = vmul.f32 %v1187, %v1094
        %v1190 = vadd.f32 %v1189, %v208
        %v1191 = vmax.f32 %v1190, 0.0
        %1193 = vrot.lane.b32.xlu0 %v1191, 64
        %v1194 = vpop.permute.xlu0 %1193
        %v1195 = vsel %vm453, %v1194, 0
        %1197 = vmatpush.msra.mxu0 0.0
        %1198 = vmatpush.msra.mxu0 0.0
        %1199 = vmatpush.msra.mxu0 0.0
        %1200 = vmatpush.msra.mxu0 0.0
        %1201 = vmatpush.msra.mxu0 0.0
        %1202 = vmatpush.msra.mxu0 0.0
        %1203 = vmatpush.msra.mxu0 0.0
        %1204 = vmatpush.msra.mxu0 0.0
        %1205 = vmatpush.msra.mxu0 0.0
        %1206 = vmatpush.msra.mxu0 0.0
        %1207 = vmatpush.msra.mxu0 0.0
        %1208 = vmatpush.msra.mxu0 0.0
        %1209 = vmatpush.msra.mxu0 %v228
        %1210 = vmatpush.msra.mxu0 %v227
        %1211 = vmatpush.msra.mxu0 %v226
        %1212 = vmatpush.msra.mxu0 %v225
        %1213 = vmatmul.f32.gmra.mxu0 %v1195
        %v1214 = vpop.f32.mrf.mxu0
        %v1215 = vadd.f32 %v230, %v1214
        %1216 = vdwg.mxu0
        %v1217 = vmax.f32 %v1215, 0.0
        %v1219 = vsel %vm240, %v1217, 0
        %1221 = vmatpush.msra.mxu0 0.0
        %1222 = vmatpush.msra.mxu0 0.0
        %1223 = vmatpush.msra.mxu0 0.0
        %1224 = vmatpush.msra.mxu0 0.0
        %1225 = vmatpush.msra.mxu0 0.0
        %1226 = vmatpush.msra.mxu0 0.0
        %1227 = vmatpush.msra.mxu0 0.0
        %1228 = vmatpush.msra.mxu0 0.0
        %1229 = vmatpush.msra.mxu0 0.0
        %1230 = vmatpush.msra.mxu0 0.0
        %1231 = vmatpush.msra.mxu0 0.0
        %1232 = vmatpush.msra.mxu0 0.0
        %1233 = vmatpush.msra.mxu0 0.0
        %1234 = vmatpush.msra.mxu0 0.0
        %1235 = vmatpush.msra.mxu0 %v232
        %1236 = vmatpush.msra.mxu0 %v231
        %1237 = vmatmul.f32.gmra.mxu0 %v1219
        %v1238 = vpop.f32.mrf.mxu0
        %v1239 = vadd.f32 %v234, %v1238
        %1240 = vdwg.mxu0
        %v1241 = vxor.u32 %v1239, 2147483648
        %v1242 = vmul.f32 %v1241, 1.442695
        %v1243 = vpow.pop %v1242
        %v1244 = vadd.f32 %v1243, 1.0
        %v1245 = vrcp.pop %v1244
        %v1246 = vmul.f32 %v1244, %v1245
        %v1247 = vsub.f32 1.0, %v1246
        %v1248 = vmul.f32 %v1245, %v1247
        %v1249 = vadd.f32 %v1245, %v1248
        %vm1250 = vweird.f32 %v1244
        %vm1251 = vweird.f32 %v1245
        %vm1252 = vmor %vm1250, %vm1251
        %v1253 = vsel %vm1252, %v1245, %v1249
        %v1254 = vand.u32 2147483647, %v1244
        %vm1255 = vcmp.eq.f32.partialorder %v1254, 8.507059e+37
        %v1256 = vand.u32 %v1244, 2147483648
        %v1257 = vor.u32 1.1754944e-38, %v1256
        %v1258 = vsel %vm1255, %v1257, %v1253
        %v1259 = vmul.f32 1.0, %v1258
        %1261 = vrot.lane.b32.xlu0 %v451, 126
        %v1262 = vpop.permute.xlu0 %1261
        %v1264 = vadd.f32 %v1259, %v1262
        %v1265 = vtanh.pop %v1264
        %1266 = vset.pattern.permute.xlu0 0
        %1267 = vperm.xlu0 %1266, %v1183
        %v1268 = vpop.permute.xlu0 %1267
        %v1270 = vmul.f32 %v1072, %v1268
        %v1271 = vsub.f32 1.0, %v1183
        %v1272 = vmul.f32 %v1271, %v1265
        %1274 = vset.pattern.permute.xlu0 0
        %1275 = vperm.xlu0 %1274, %v1272
        %v1276 = vpop.permute.xlu0 %1275
        %v1278 = vadd.f32 %v1270, %v1276
        %1279 = vst.msk [vmem:[#allocation2] sm:$0xff] %vm453, %v1278
        %p1280 = scmp.eq.s32.totalorder %s17, 1
        // Predicated region
        $region37: #{tpu_custom_call.1} parent=27 // pred_check
          %p1281 = pneg %p1280
        $region38: #{tpu_custom_call.1} parent=27 // pred_check_branch
          %1283 = sbr.rel (%p1281) target = $region40
        $region39: #{tpu_custom_call.1} parent=27 // pred_region
          %1284 = vst.msk [vmem:[#allocation6] sm:$0xff] %vm453, %v1278
          %v1285 = vld [vmem:[#allocation3 + $0x190] sm:$0xff]
          %v1286 = vld [vmem:[#allocation3 + $0x198] sm:$0xff]
          %v1287 = vld [vmem:[#allocation3 + $0x1a0] sm:$0xff]
          %v1288 = vld [vmem:[#allocation3 + $0x1a8] sm:$0xff]
          %v1289 = vld [vmem:[#allocation3 + $0x1b0] sm:$0x1]
          %v1290 = vld [vmem:[#allocation3 + $0x1b8] sm:$0x1]
          %v1291 = vld [vmem:[#allocation3 + $0x1c0] sm:$0x1]
          %v1292 = vld [vmem:[#allocation3 + $0x1c8] sm:$0xff]
          %v1293 = vld [vmem:[#allocation3 + $0x1d0] sm:$0xff]
          %v1294 = vld [vmem:[#allocation3 + $0x1d8] sm:$0x1]
          %v1295 = vperm.slane %v1289, 0
          %v1297 = vsel %vm453, %v1278, 0
          %1299 = vmatpush.msra.mxu0 0.0
          %1300 = vmatpush.msra.mxu0 0.0
          %1301 = vmatpush.msra.mxu0 0.0
          %1302 = vmatpush.msra.mxu0 0.0
          %1303 = vmatpush.msra.mxu0 0.0
          %1304 = vmatpush.msra.mxu0 0.0
          %1305 = vmatpush.msra.mxu0 0.0
          %1306 = vmatpush.msra.mxu0 0.0
          %1307 = vmatpush.msra.mxu0 0.0
          %1308 = vmatpush.msra.mxu0 0.0
          %1309 = vmatpush.msra.mxu0 0.0
          %1310 = vmatpush.msra.mxu0 0.0
          %1311 = vmatpush.msra.mxu0 %v1288
          %1312 = vmatpush.msra.mxu0 %v1287
          %1313 = vmatpush.msra.mxu0 %v1286
          %1314 = vmatpush.msra.mxu0 %v1285
          %1315 = vmatmul.f32.gmra.mxu0 %v1297
          %v1316 = vpop.f32.mrf.mxu0
          %v1317 = vadd.f32 %v1295, %v1316
          %1318 = vdwg.mxu0
          %v1319 = vmax.f32 %v1317, 0.0
          %1321 = vset.pattern.permute.xlu0 0
          %1322 = vperm.xlu0 %1321, %v1319
          %v1323 = vpop.permute.xlu0 %1322
          %v1325 = vperm.slane %v1290, 0
          %v1326 = vmul.f32 %v1323, %v1325
          %v1327 = vperm.slane %v1291, 0
          %v1328 = vadd.f32 %v1326, %v1327
          %v1329 = vmax.f32 %v1328, 0.0
          %v1330 = vperm.slane %v1294, 0
          %v1332 = vsel %vm240, %v1329, 0
          %1334 = vmatpush.msra.mxu0 0.0
          %1335 = vmatpush.msra.mxu0 0.0
          %1336 = vmatpush.msra.mxu0 0.0
          %1337 = vmatpush.msra.mxu0 0.0
          %1338 = vmatpush.msra.mxu0 0.0
          %1339 = vmatpush.msra.mxu0 0.0
          %1340 = vmatpush.msra.mxu0 0.0
          %1341 = vmatpush.msra.mxu0 0.0
          %1342 = vmatpush.msra.mxu0 0.0
          %1343 = vmatpush.msra.mxu0 0.0
          %1344 = vmatpush.msra.mxu0 0.0
          %1345 = vmatpush.msra.mxu0 0.0
          %1346 = vmatpush.msra.mxu0 0.0
          %1347 = vmatpush.msra.mxu0 0.0
          %1348 = vmatpush.msra.mxu0 %v1293
          %1349 = vmatpush.msra.mxu0 %v1292
          %1350 = vmatmul.f32.gmra.mxu0 %v1332
          %v1351 = vpop.f32.mrf.mxu0
          %v1352 = vadd.f32 %v1330, %v1351
          %1353 = vdwg.mxu0
          %v1354 = vxor.u32 %v1352, 2147483648
          %v1355 = vmul.f32 %v1354, 1.442695
          %v1356 = vpow.pop %v1355
          %v1357 = vadd.f32 %v1356, 1.0
          %v1358 = vrcp.pop %v1357
          %v1359 = vmul.f32 %v1357, %v1358
          %v1360 = vsub.f32 1.0, %v1359
          %v1361 = vmul.f32 %v1358, %v1360
          %v1362 = vadd.f32 %v1358, %v1361
          %vm1363 = vweird.f32 %v1357
          %vm1364 = vweird.f32 %v1358
          %vm1365 = vmor %vm1363, %vm1364
          %v1366 = vsel %vm1365, %v1358, %v1362
          %v1367 = vand.u32 2147483647, %v1357
          %vm1368 = vcmp.eq.f32.partialorder %v1367, 8.507059e+37
          %v1369 = vand.u32 %v1357, 2147483648
          %v1370 = vor.u32 1.1754944e-38, %v1369
          %v1371 = vsel %vm1368, %v1370, %v1366
          %v1372 = vmul.f32 1.0, %v1371
          %v1373 = vxor.u32 %v1372, 2147483648
          %v1374 = vmul.f32 %v1373, 1.442695
          %v1375 = vpow.pop %v1374
          %v1376 = vadd.f32 %v1375, 1.0
          %v1377 = vrcp.pop %v1376
          %v1378 = vmul.f32 %v1376, %v1377
          %v1379 = vsub.f32 1.0, %v1378
          %v1380 = vmul.f32 %v1377, %v1379
          %v1381 = vadd.f32 %v1377, %v1380
          %vm1382 = vweird.f32 %v1376
          %vm1383 = vweird.f32 %v1377
          %vm1384 = vmor %vm1382, %vm1383
          %v1385 = vsel %vm1384, %v1377, %v1381
          %v1386 = vand.u32 2147483647, %v1376
          %vm1387 = vcmp.eq.f32.partialorder %v1386, 8.507059e+37
          %v1388 = vand.u32 %v1376, 2147483648
          %v1389 = vor.u32 1.1754944e-38, %v1388
          %v1390 = vsel %vm1387, %v1389, %v1385
          %v1391 = vmul.f32 1.0, %v1390
          %vm1392 = vcmask 7168
          %1393 = vst.msk [vmem:[%s2] sm:$0xff] %vm1392, %v1391
        $region40: #{tpu_custom_call.1} parent=27 // pred_fallthru
          _
        // Predicated region
        $region41: #{tpu_custom_call.1} parent=27 // pred_check
          %p1394 = pneg %p77
        $region42: #{tpu_custom_call.1} parent=27 // pred_check_branch
          %1396 = sbr.rel (%p1394) target = $region44
        $region43: #{tpu_custom_call.1} parent=27 // pred_region
          _
        $region44: #{tpu_custom_call.1} parent=27 // pred_fallthru
          _
        // Predicated region
        $region45: #{tpu_custom_call.1} parent=27 // pred_check
          %p1397 = pneg %p98
        $region46: #{tpu_custom_call.1} parent=27 // pred_check_branch
          %1399 = sbr.rel (%p1397) target = $region48
        $region47: #{tpu_custom_call.1} parent=27 // pred_region
          %1401 = vsyncadd [#allocation5], 0
          %s1403 = sshll.u32 [#allocation6], 4
          %s1404 = int_to_ptr.vmem [resolvable:$true] %s1403
          %s1405 = sshll.u32 %s3, 4
          %s1406 = int_to_ptr.hbm [resolvable:$true] %s1405
          %1408 = dma.vmem_to_hbm [thread:$0]  %s1404, 128, %s1406, [#allocation5]
        $region48: #{tpu_custom_call.1} parent=27 // pred_fallthru
          _
        // Predicated region
        $region49: #{tpu_custom_call.1} parent=27 // pred_check
          %p1409 = pneg %p77
        $region50: #{tpu_custom_call.1} parent=27 // pred_check_branch
          %1411 = sbr.rel (%p1409) target = $region52
        $region51: #{tpu_custom_call.1} parent=27 // pred_region
          _
        $region52: #{tpu_custom_call.1} parent=27 // pred_fallthru
          _
        // Predicated region
        $region53: #{tpu_custom_call.1} parent=27 // pred_check
          %p1412 = pneg %p98
        $region54: #{tpu_custom_call.1} parent=27 // pred_check_branch
          %1414 = sbr.rel (%p1412) target = $region56
        $region55: #{tpu_custom_call.1} parent=27 // pred_region
          %1416 = dma.done [#allocation5], 128
        $region56: #{tpu_custom_call.1} parent=27 // pred_fallthru
          _
      $region28: #{tpu_custom_call.1} parent=5 // pred_fallthru
        _
      %p1417 = scmp.le.s32.totalorder 2, %s12
      // Predicated region
      $region57: #{tpu_custom_call.1} parent=5 // pred_check
        %p1418 = pneg %p1417
      $region58: #{tpu_custom_call.1} parent=5 // pred_check_branch
        %1420 = sbr.rel (%p1418) target = $region60
      $region59: #{tpu_custom_call.1} parent=5 // pred_region
        %s1421 = ssub.s32 %s12, 2
      $region60: #{tpu_custom_call.1} parent=5 // pred_fallthru
        _
    $region6: #{tpu_custom_call.1} parent=1 // loop_footer
      %s16 = sadd.s32 1, %s12
    $region7: #{tpu_custom_call.1} parent=1 // loop_footer_branch
      %11 = sbr.rel target = $region3
    $region8: #{tpu_custom_call.1} parent=1 // loop_exit
      _
    %1422 = vsyncpa [#allocation4], 1
    %s1423 = scalar_lea.sflag [#allocation4], 1
    %1424 = vsyncpa %s1423, 1
    %1425 = vsyncpa [#allocation5], 1
    %s1426 = scalar_lea.sflag [#allocation5], 1
    %1427 = vsyncpa %s1426, 1

</llo_original>
